<compile_context>
chip_gen: v7x
topology: tpu7x:2x2x1
jax: 0.10.0
libtpu: 0.0.40
codegen_flags: <defaults>
</compile_context>

<pallas_src>
import jax
import jax.numpy as jnp
from jax.experimental import pallas as pl
from jax.experimental.pallas import tpu as pltpu

B = 2
C, H, W = 3, 256, 256
K = C * H * W                # 196608 (fixed by the module's Linear in_features)
LANES = 128
NSPLIT = 2                   # K split in half: 2 grid steps / 2 cores on v7x
TK = K // NSPLIT             # 98304 elements per step
TR = TK // LANES             # 768 rows per tile (divisible by 8)

assert K % NSPLIT == 0 and TK % LANES == 0 and TR % 8 == 0


def _partial_dot_kernel(x_ref, w_ref, o_ref):
    """One K-half per invocation.

    x_ref: (B, TR, 128) f32   -- half of the flattened activations
    w_ref: (TR, 128) f32      -- matching half of the lane-dense weight
    o_ref: (1, B, 1)  f32     -- this core's partial dot product
    """
    # Lane-dense VPU multiply, row-sum to (B, 128), then one cross-lane reduce.
    prod = x_ref[...] * w_ref[...][None, :, :]          # (B, TR, 128)
    row_sum = jnp.sum(prod, axis=1)                      # (B, 128)  (VALU-heavy)
    partial = jnp.sum(row_sum, axis=1, keepdims=True)    # (B, 1)    (single XLU reduce)
    o_ref[...] = partial[None, :, :]


def model_forward(x, weight, bias):
    """x: (B, C, H, W) f32; weight: (1, K) f32; bias: (1,) f32 -> (B, 1) f32."""
    batch = x.shape[0]
    xr = x.reshape(batch, K // LANES, LANES)   # row-major, same order as flatten(1)
    wr = weight.reshape(K // LANES, LANES)     # lane-dense weight

    partials = pl.pallas_call(
        _partial_dot_kernel,
        out_shape=jax.ShapeDtypeStruct((NSPLIT, batch, 1), jnp.float32),
        grid_spec=pltpu.PrefetchScalarGridSpec(
            num_scalar_prefetch=0,
            grid=(NSPLIT,),
            in_specs=[
                pl.BlockSpec((batch, TR, LANES), lambda c: (0, c, 0)),  # x half
                pl.BlockSpec((TR, LANES), lambda c: (c, 0)),            # w half
            ],
            out_specs=pl.BlockSpec((1, batch, 1), lambda c: (c, 0, 0)),
        ),
        compiler_params=pltpu.CompilerParams(
            # Each step writes its own output block -> safe to run in parallel
            # (uses both TensorCores on v7x; no-op on single-TC v5e/v6e).
            dimension_semantics=("parallel",),
            # NOTE: footprint ~4 MiB << default scoped VMEM on all generations;
            # set vmem_limit_bytes explicitly only if batch grows (v5e).
        ),
        cost_estimate=pl.CostEstimate(
            flops=2 * batch * K,
            transcendentals=0,
            bytes_accessed=(batch * K + K) * 4,
        ),
    )(xr, wr)

    # Trivial combine + fused epilogue (runs as one tiny XLA fusion under jit).
    total = jnp.sum(partials, axis=0)              # (B, 1)
    return jnp.maximum(total + bias - 1.0, 0.0)    # relu(linear(x) - 1)


def reference_forward(x, weight, bias):
    v3 = x.reshape(x.shape[0], -1) @ weight.reshape(1, -1).T + bias
    return jnp.maximum(v3 - 1.0, 0.0)


if __name__ == "__main__":
    key = jax.random.PRNGKey(0)
    kx, kw, kb = jax.random.split(key, 3)

    # Deterministic parameter init (PyTorch Linear default: U(-1/sqrt(K), 1/sqrt(K)))
    bound = 1.0 / (K ** 0.5)
    weight = jax.random.uniform(kw, (1, K), jnp.float32, -bound, bound)
    bias = jax.random.uniform(kb, (1,), jnp.float32, -bound, bound)

    x = jax.random.normal(kx, (B, C, H, W), jnp.float32)

    fwd = jax.jit(model_forward)
    out = jax.block_until_ready(fwd(x, weight, bias))

    ref = reference_forward(x, weight, bias)
    assert out.shape == (B, 1), out.shape
    assert jnp.allclose(out, ref, atol=1e-3, rtol=1e-3), (out, ref)

    print("KERNEL_OK")
</pallas_src>

<mosaic_0001>
module attributes {stable_mosaic.version = 11 : i64} {
  func.func @_partial_dot_kernel(%arg0: i32, %arg1: memref<2x768x128xf32, #tpu.memory_space<vmem>>, %arg2: memref<768x128xf32, #tpu.memory_space<vmem>>, %arg3: memref<1x2x1xf32, #tpu.memory_space<vmem>>) attributes {dimension_semantics = [#tpu.dimension_semantics<parallel>], iteration_bounds = array<i64: 2>, scalar_prefetch = 0 : i64, scratch_operands = 0 : i64, tpu.core_type = #tpu.core_type<tc>, window_params = [{transform_indices = @transform_0, window_bounds = array<i64: 2, 768, 128>}, {transform_indices = @transform_1, window_bounds = array<i64: 768, 128>}, {transform_indices = @transform_2, window_bounds = array<i64: 1, 2, 1>}]} {
    %c0 = arith.constant 0 : index
    %c0_0 = arith.constant 0 : index
    %c0_1 = arith.constant 0 : index
    %0 = vector.load %arg1[%c0, %c0_0, %c0_1] : memref<2x768x128xf32, #tpu.memory_space<vmem>>, vector<2x768x128xf32>
    %c0_2 = arith.constant 0 : index
    %c0_3 = arith.constant 0 : index
    %1 = vector.load %arg2[%c0_2, %c0_3] : memref<768x128xf32, #tpu.memory_space<vmem>>, vector<768x128xf32>
    %2 = vector.shape_cast %1 : vector<768x128xf32> to vector<1x768x128xf32>
    %3 = vector.broadcast %2 : vector<1x768x128xf32> to vector<2x768x128xf32>
    %4 = arith.mulf %0, %3 : vector<2x768x128xf32>
    %cst = arith.constant dense<0.000000e+00> : vector<2x128xf32>
    %5 = vector.multi_reduction <add>, %4, %cst [1] : vector<2x768x128xf32> to vector<2x128xf32>
    %cst_4 = arith.constant dense<0.000000e+00> : vector<2xf32>
    %6 = vector.multi_reduction <add>, %5, %cst_4 [1] : vector<2x128xf32> to vector<2xf32>
    %7 = vector.shape_cast %6 : vector<2xf32> to vector<2x1xf32>
    %8 = vector.shape_cast %7 : vector<2x1xf32> to vector<1x2x1xf32>
    %c0_5 = arith.constant 0 : index
    %c0_6 = arith.constant 0 : index
    %c0_7 = arith.constant 0 : index
    %9 = vector.load %arg3[%c0_5, %c0_6, %c0_7] : memref<1x2x1xf32, #tpu.memory_space<vmem>>, vector<1x2x1xf32>
    tpu.vector_store %arg3[%c0_5, %c0_6, %c0_7], %8 {strides = array<i32>} : memref<1x2x1xf32, #tpu.memory_space<vmem>>, vector<1x2x1xf32>,
    return
  }
  func.func @transform_0(%arg0: i32) -> (i32, i32, i32) {
    %c0_i32 = arith.constant 0 : i32
    %c0_i32_0 = arith.constant 0 : i32
    %c0_i32_1 = arith.constant 0 : i32
    return %c0_i32, %arg0, %c0_i32_0 : i32, i32, i32
  }
  func.func @transform_1(%arg0: i32) -> (i32, i32) {
    %c0_i32 = arith.constant 0 : i32
    %c0_i32_0 = arith.constant 0 : i32
    return %arg0, %c0_i32 : i32, i32
  }
  func.func @transform_2(%arg0: i32) -> (i32, i32, i32) {
    %c0_i32 = arith.constant 0 : i32
    %c0_i32_0 = arith.constant 0 : i32
    %c0_i32_1 = arith.constant 0 : i32
    return %arg0, %c0_i32, %c0_i32_0 : i32, i32, i32
  }
}

</mosaic_0001>

<llo_original>
// kernel: model_forward.1
$region0: #{model_forward.1}
  #allocation0 [shape = 'u32[]', space=smem, size = 0x4, offset = 0x4, fixed_abs, tag = 'smem constant byte address 0x4 - core index']
  #allocation1 [shape = 'u32[144,128]{1,0:T(1,128)}', space=vmem, size = 0x12000, scoped, tag = 'internal scratch']
  %s0 = inlined_call_operand.vmem [shape: f32[2,1536,128], index: 0, kind: input, shape index: {}]
  %s1 = inlined_call_operand.vmem [shape: f32[1536,128], index: 1, kind: input, shape index: {}]
  %s2 = inlined_call_operand.vmem [shape: f32[2,2,1], index: 2, kind: output, shape index: {}]
  %s3 = sld [smem:[#allocation0]]
  $region79: #{model_forward.1} parent=0
    _
  %s5 = ssub.s32 1, %s3
  %s6 = scalar_select 0, %s5, %s3
  $region1: #{model_forward.1} parent=0
    #allocation2 [shape = 'u8[1572864]{0}', space=vmem, size = 0x180000, scoped, tag = 'input window, operand 0']
    loop: start=0, step=1, limit=4
    $region2: #{model_forward.1} parent=1 // loop_pre_header
      _
    $region3: #{model_forward.1} parent=1 // loop_header
      %s8 = sphi 0, %s12
      %p9 = scmp.ge.s32.totalorder %s8, 4
      %s18 = sphi 0, %s20
      %s21 = sphi 0, %s18
      %s22 = sphi 0, %s21
      %s38 = sphi 0, %s22
      %s44 = sphi 0, %s46
      %s47 = sphi 0, %s44
      %s48 = sphi 0, %s47
      %s64 = sphi 0, %s48
      %s70 = sphi 0, %s72
      %s73 = sphi 0, %s70
      %s74 = sphi 0, %s73
      %s90 = sphi 0, %s74
    $region4: #{model_forward.1} parent=1 // loop_header_branch
      %11 = sbr.rel (%p9) target = $region8
    $region5: #{model_forward.1} parent=1 // loop_body
      %s13 = ssub.s32 %s8, 1
      %s14 = ssub.s32 %s8, 2
      %s15 = sadd.s32 %s8, 1
      %s16 = ssub.s32 %s8, %s15
      %p17 = scmp.eq.s32.totalorder %s16, 0
      %s19 = sadd.s32 %s18, 1
      %s20 = scalar_select %p17, %s18, %s19
      %p23 = pneg %p17
      %p24 = scmp.eq.s32.totalorder %s8, 1
      %p25 = por %p23, %p24
      %p26 = scmp.ne.s32.totalorder %s18, %s21
      %p27 = scmp.eq.s32.totalorder %s8, 0
      %p28 = por %p26, %p27
      %p29 = scmp.ne.s32.totalorder %s18, %s21
      %p30 = scmp.eq.s32.totalorder %s13, 1
      %p31 = por %p29, %p30
      %p32 = scmp.ne.s32.totalorder %s21, %s22
      %p33 = scmp.eq.s32.totalorder %s13, 0
      %p34 = por %p32, %p33
      %p35 = scmp.ne.s32.totalorder %s21, %s22
      %p36 = scmp.eq.s32.totalorder %s14, 1
      %p37 = por %p35, %p36
      %p39 = scmp.ne.s32.totalorder %s22, %s38
      %p40 = scmp.eq.s32.totalorder %s14, 0
      %p41 = por %p39, %p40
      %s42 = ssub.s32 %s8, %s15
      %p43 = scmp.eq.s32.totalorder %s42, 0
      %s45 = sadd.s32 %s44, 1
      %s46 = scalar_select %p43, %s44, %s45
      %p49 = pneg %p43
      %p50 = scmp.eq.s32.totalorder %s8, 1
      %p51 = por %p49, %p50
      %p52 = scmp.ne.s32.totalorder %s44, %s47
      %p53 = scmp.eq.s32.totalorder %s8, 0
      %p54 = por %p52, %p53
      %p55 = scmp.ne.s32.totalorder %s44, %s47
      %p56 = scmp.eq.s32.totalorder %s13, 1
      %p57 = por %p55, %p56
      %p58 = scmp.ne.s32.totalorder %s47, %s48
      %p59 = scmp.eq.s32.totalorder %s13, 0
      %p60 = por %p58, %p59
      %p61 = scmp.ne.s32.totalorder %s47, %s48
      %p62 = scmp.eq.s32.totalorder %s14, 1
      %p63 = por %p61, %p62
      %p65 = scmp.ne.s32.totalorder %s48, %s64
      %p66 = scmp.eq.s32.totalorder %s14, 0
      %p67 = por %p65, %p66
      %s68 = ssub.s32 %s8, %s15
      %p69 = scmp.eq.s32.totalorder %s68, 0
      %s71 = sadd.s32 %s70, 1
      %s72 = scalar_select %p69, %s70, %s71
      %p75 = pneg %p69
      %p76 = scmp.eq.s32.totalorder %s8, 1
      %p77 = por %p75, %p76
      %p78 = scmp.ne.s32.totalorder %s70, %s73
      %p79 = scmp.eq.s32.totalorder %s8, 0
      %p80 = por %p78, %p79
      %p81 = scmp.ne.s32.totalorder %s70, %s73
      %p82 = scmp.eq.s32.totalorder %s13, 1
      %p83 = por %p81, %p82
      %p84 = scmp.ne.s32.totalorder %s73, %s74
      %p85 = scmp.eq.s32.totalorder %s13, 0
      %p86 = por %p84, %p85
      %p87 = scmp.ne.s32.totalorder %s73, %s74
      %p88 = scmp.eq.s32.totalorder %s14, 1
      %p89 = por %p87, %p88
      %p91 = scmp.ne.s32.totalorder %s74, %s90
      %p92 = scmp.eq.s32.totalorder %s14, 0
      %p93 = por %p91, %p92
      %p94 = scmp.le.s32.totalorder 1, %s8
      %p95 = scmp.lt.s32.totalorder %s8, 3
      %p96 = pnand %p94, %p95
      %p97 = pneg %p96
      // Predicated region
      $region9: #{model_forward.1} parent=5 // pred_check
        _
      $region10: #{model_forward.1} parent=5 // pred_check_branch
        %99 = sbr.rel (%p96) target = $region12
      $region11: #{model_forward.1} parent=5 // pred_region
        %s100 = ssub.s32 %s8, 1
      $region12: #{model_forward.1} parent=5 // pred_fallthru
        _
      %p101 = scmp.lt.s32.totalorder %s8, 2
      // Predicated region
      $region13: #{model_forward.1} parent=5 // pred_check
        %p102 = pneg %p101
      $region14: #{model_forward.1} parent=5 // pred_check_branch
        %104 = sbr.rel (%p102) target = $region16
      $region15: #{model_forward.1} parent=5 // pred_region
        // Predicated region
        $region17: #{model_forward.1} parent=15 // pred_check
          %p105 = pneg %p28
        $region18: #{model_forward.1} parent=15 // pred_check_branch
          %107 = sbr.rel (%p105) target = $region20
        $region19: #{model_forward.1} parent=15 // pred_region
          %s108 = sand.u32 %s18, 1
          %s109 = sand.u32 %s18, 1
          %s110 = smul.addr %s109, 1536
          %s111 = scalar_lea.vmem [#allocation2], %s110
          %s112 = smul.u32 96, %s8
          %s113 = smul.addr %s112, 8
          %s114 = scalar_lea.vmem %s0, %s113
          // Predicated region
          $region21: #{model_forward.1} parent=19 // pred_check
            _
          $region22: #{model_forward.1} parent=19 // pred_check_branch
            %116 = sbr.rel (0) target = $region24
          $region23: #{model_forward.1} parent=19 // pred_region
            // Predicated region
            $region25: #{model_forward.1} parent=23 // pred_check
              _
            $region26: #{model_forward.1} parent=23 // pred_check_branch
              %118 = sbr.rel (0) target = $region28
            $region27: #{model_forward.1} parent=23 // pred_region
              // Predicated region
              $region40: #{model_forward.1} parent=27 // pred_check
                _
              $region41: #{model_forward.1} parent=27 // pred_check_branch
                %515 = sbr.rel (0) target = $region43
              $region42: #{model_forward.1} parent=27 // pred_region
                loop: start=0, step=1, limit=1
                $region44: #{model_forward.1} parent=42 // loop_pre_header
                  _
                $region45: #{model_forward.1} parent=42 // loop_header
                  %s517 = sphi 0, %s521
                  %p518 = scmp.ge.s32.totalorder %s517, 1
                  %s522 = sphi %s114, %s114
                  %s523 = sphi %s111, %s111
                $region46: #{model_forward.1} parent=42 // loop_header_branch
                  %520 = sbr.rel (%p518) target = $region50
                $region47: #{model_forward.1} parent=42 // loop_body
                  %v524 = vld [vmem:[%s522] sm:$0xff]
                  %525 = vst [vmem:[%s523] sm:$0xff] %v524
                  %v526 = vld [vmem:[%s522 + $0x8] sm:$0xff]
                  %527 = vst [vmem:[%s523 + $0x8] sm:$0xff] %v526
                  %v528 = vld [vmem:[%s522 + $0x10] sm:$0xff]
                  %529 = vst [vmem:[%s523 + $0x10] sm:$0xff] %v528
                  %v530 = vld [vmem:[%s522 + $0x18] sm:$0xff]
                  %531 = vst [vmem:[%s523 + $0x18] sm:$0xff] %v530
                  %v532 = vld [vmem:[%s522 + $0x20] sm:$0xff]
                  %533 = vst [vmem:[%s523 + $0x20] sm:$0xff] %v532
                  %v534 = vld [vmem:[%s522 + $0x28] sm:$0xff]
                  %535 = vst [vmem:[%s523 + $0x28] sm:$0xff] %v534
                  %v536 = vld [vmem:[%s522 + $0x30] sm:$0xff]
                  %537 = vst [vmem:[%s523 + $0x30] sm:$0xff] %v536
                  %v538 = vld [vmem:[%s522 + $0x38] sm:$0xff]
                  %539 = vst [vmem:[%s523 + $0x38] sm:$0xff] %v538
                  %v540 = vld [vmem:[%s522 + $0x40] sm:$0xff]
                  %541 = vst [vmem:[%s523 + $0x40] sm:$0xff] %v540
                  %v542 = vld [vmem:[%s522 + $0x48] sm:$0xff]
                  %543 = vst [vmem:[%s523 + $0x48] sm:$0xff] %v542
                  %v544 = vld [vmem:[%s522 + $0x50] sm:$0xff]
                  %545 = vst [vmem:[%s523 + $0x50] sm:$0xff] %v544
                  %v546 = vld [vmem:[%s522 + $0x58] sm:$0xff]
                  %547 = vst [vmem:[%s523 + $0x58] sm:$0xff] %v546
                  %v548 = vld [vmem:[%s522 + $0x60] sm:$0xff]
                  %549 = vst [vmem:[%s523 + $0x60] sm:$0xff] %v548
                  %v550 = vld [vmem:[%s522 + $0x68] sm:$0xff]
                  %551 = vst [vmem:[%s523 + $0x68] sm:$0xff] %v550
                  %v552 = vld [vmem:[%s522 + $0x70] sm:$0xff]
                  %553 = vst [vmem:[%s523 + $0x70] sm:$0xff] %v552
                  %v554 = vld [vmem:[%s522 + $0x78] sm:$0xff]
                  %555 = vst [vmem:[%s523 + $0x78] sm:$0xff] %v554
                  %v556 = vld [vmem:[%s522 + $0x80] sm:$0xff]
                  %557 = vst [vmem:[%s523 + $0x80] sm:$0xff] %v556
                  %v558 = vld [vmem:[%s522 + $0x88] sm:$0xff]
                  %559 = vst [vmem:[%s523 + $0x88] sm:$0xff] %v558
                  %v560 = vld [vmem:[%s522 + $0x90] sm:$0xff]
                  %561 = vst [vmem:[%s523 + $0x90] sm:$0xff] %v560
                  %v562 = vld [vmem:[%s522 + $0x98] sm:$0xff]
                  %563 = vst [vmem:[%s523 + $0x98] sm:$0xff] %v562
                  %v564 = vld [vmem:[%s522 + $0xa0] sm:$0xff]
                  %565 = vst [vmem:[%s523 + $0xa0] sm:$0xff] %v564
                  %v566 = vld [vmem:[%s522 + $0xa8] sm:$0xff]
                  %567 = vst [vmem:[%s523 + $0xa8] sm:$0xff] %v566
                  %v568 = vld [vmem:[%s522 + $0xb0] sm:$0xff]
                  %569 = vst [vmem:[%s523 + $0xb0] sm:$0xff] %v568
                  %v570 = vld [vmem:[%s522 + $0xb8] sm:$0xff]
                  %571 = vst [vmem:[%s523 + $0xb8] sm:$0xff] %v570
                  %v572 = vld [vmem:[%s522 + $0xc0] sm:$0xff]
                  %573 = vst [vmem:[%s523 + $0xc0] sm:$0xff] %v572
                  %v574 = vld [vmem:[%s522 + $0xc8] sm:$0xff]
                  %575 = vst [vmem:[%s523 + $0xc8] sm:$0xff] %v574
                  %v576 = vld [vmem:[%s522 + $0xd0] sm:$0xff]
                  %577 = vst [vmem:[%s523 + $0xd0] sm:$0xff] %v576
                  %v578 = vld [vmem:[%s522 + $0xd8] sm:$0xff]
                  %579 = vst [vmem:[%s523 + $0xd8] sm:$0xff] %v578
                  %v580 = vld [vmem:[%s522 + $0xe0] sm:$0xff]
                  %581 = vst [vmem:[%s523 + $0xe0] sm:$0xff] %v580
                  %v582 = vld [vmem:[%s522 + $0xe8] sm:$0xff]
                  %583 = vst [vmem:[%s523 + $0xe8] sm:$0xff] %v582
                  %v584 = vld [vmem:[%s522 + $0xf0] sm:$0xff]
                  %585 = vst [vmem:[%s523 + $0xf0] sm:$0xff] %v584
                  %v586 = vld [vmem:[%s522 + $0xf8] sm:$0xff]
                  %587 = vst [vmem:[%s523 + $0xf8] sm:$0xff] %v586
                  %v588 = vld [vmem:[%s522 + $0x100] sm:$0xff]
                  %589 = vst [vmem:[%s523 + $0x100] sm:$0xff] %v588
                  %v590 = vld [vmem:[%s522 + $0x108] sm:$0xff]
                  %591 = vst [vmem:[%s523 + $0x108] sm:$0xff] %v590
                  %v592 = vld [vmem:[%s522 + $0x110] sm:$0xff]
                  %593 = vst [vmem:[%s523 + $0x110] sm:$0xff] %v592
                  %v594 = vld [vmem:[%s522 + $0x118] sm:$0xff]
                  %595 = vst [vmem:[%s523 + $0x118] sm:$0xff] %v594
                  %v596 = vld [vmem:[%s522 + $0x120] sm:$0xff]
                  %597 = vst [vmem:[%s523 + $0x120] sm:$0xff] %v596
                  %v598 = vld [vmem:[%s522 + $0x128] sm:$0xff]
                  %599 = vst [vmem:[%s523 + $0x128] sm:$0xff] %v598
                  %v600 = vld [vmem:[%s522 + $0x130] sm:$0xff]
                  %601 = vst [vmem:[%s523 + $0x130] sm:$0xff] %v600
                  %v602 = vld [vmem:[%s522 + $0x138] sm:$0xff]
                  %603 = vst [vmem:[%s523 + $0x138] sm:$0xff] %v602
                  %v604 = vld [vmem:[%s522 + $0x140] sm:$0xff]
                  %605 = vst [vmem:[%s523 + $0x140] sm:$0xff] %v604
                  %v606 = vld [vmem:[%s522 + $0x148] sm:$0xff]
                  %607 = vst [vmem:[%s523 + $0x148] sm:$0xff] %v606
                  %v608 = vld [vmem:[%s522 + $0x150] sm:$0xff]
                  %609 = vst [vmem:[%s523 + $0x150] sm:$0xff] %v608
                  %v610 = vld [vmem:[%s522 + $0x158] sm:$0xff]
                  %611 = vst [vmem:[%s523 + $0x158] sm:$0xff] %v610
                  %v612 = vld [vmem:[%s522 + $0x160] sm:$0xff]
                  %613 = vst [vmem:[%s523 + $0x160] sm:$0xff] %v612
                  %v614 = vld [vmem:[%s522 + $0x168] sm:$0xff]
                  %615 = vst [vmem:[%s523 + $0x168] sm:$0xff] %v614
                  %v616 = vld [vmem:[%s522 + $0x170] sm:$0xff]
                  %617 = vst [vmem:[%s523 + $0x170] sm:$0xff] %v616
                  %v618 = vld [vmem:[%s522 + $0x178] sm:$0xff]
                  %619 = vst [vmem:[%s523 + $0x178] sm:$0xff] %v618
                  %v620 = vld [vmem:[%s522 + $0x180] sm:$0xff]
                  %621 = vst [vmem:[%s523 + $0x180] sm:$0xff] %v620
                  %v622 = vld [vmem:[%s522 + $0x188] sm:$0xff]
                  %623 = vst [vmem:[%s523 + $0x188] sm:$0xff] %v622
                  %v624 = vld [vmem:[%s522 + $0x190] sm:$0xff]
                  %625 = vst [vmem:[%s523 + $0x190] sm:$0xff] %v624
                  %v626 = vld [vmem:[%s522 + $0x198] sm:$0xff]
                  %627 = vst [vmem:[%s523 + $0x198] sm:$0xff] %v626
                  %v628 = vld [vmem:[%s522 + $0x1a0] sm:$0xff]
                  %629 = vst [vmem:[%s523 + $0x1a0] sm:$0xff] %v628
                  %v630 = vld [vmem:[%s522 + $0x1a8] sm:$0xff]
                  %631 = vst [vmem:[%s523 + $0x1a8] sm:$0xff] %v630
                  %v632 = vld [vmem:[%s522 + $0x1b0] sm:$0xff]
                  %633 = vst [vmem:[%s523 + $0x1b0] sm:$0xff] %v632
                  %v634 = vld [vmem:[%s522 + $0x1b8] sm:$0xff]
                  %635 = vst [vmem:[%s523 + $0x1b8] sm:$0xff] %v634
                  %v636 = vld [vmem:[%s522 + $0x1c0] sm:$0xff]
                  %637 = vst [vmem:[%s523 + $0x1c0] sm:$0xff] %v636
                  %v638 = vld [vmem:[%s522 + $0x1c8] sm:$0xff]
                  %639 = vst [vmem:[%s523 + $0x1c8] sm:$0xff] %v638
                  %v640 = vld [vmem:[%s522 + $0x1d0] sm:$0xff]
                  %641 = vst [vmem:[%s523 + $0x1d0] sm:$0xff] %v640
                  %v642 = vld [vmem:[%s522 + $0x1d8] sm:$0xff]
                  %643 = vst [vmem:[%s523 + $0x1d8] sm:$0xff] %v642
                  %v644 = vld [vmem:[%s522 + $0x1e0] sm:$0xff]
                  %645 = vst [vmem:[%s523 + $0x1e0] sm:$0xff] %v644
                  %v646 = vld [vmem:[%s522 + $0x1e8] sm:$0xff]
                  %647 = vst [vmem:[%s523 + $0x1e8] sm:$0xff] %v646
                  %v648 = vld [vmem:[%s522 + $0x1f0] sm:$0xff]
                  %649 = vst [vmem:[%s523 + $0x1f0] sm:$0xff] %v648
                  %v650 = vld [vmem:[%s522 + $0x1f8] sm:$0xff]
                  %651 = vst [vmem:[%s523 + $0x1f8] sm:$0xff] %v650
                  %v652 = vld [vmem:[%s522 + $0x200] sm:$0xff]
                  %653 = vst [vmem:[%s523 + $0x200] sm:$0xff] %v652
                  %v654 = vld [vmem:[%s522 + $0x208] sm:$0xff]
                  %655 = vst [vmem:[%s523 + $0x208] sm:$0xff] %v654
                  %v656 = vld [vmem:[%s522 + $0x210] sm:$0xff]
                  %657 = vst [vmem:[%s523 + $0x210] sm:$0xff] %v656
                  %v658 = vld [vmem:[%s522 + $0x218] sm:$0xff]
                  %659 = vst [vmem:[%s523 + $0x218] sm:$0xff] %v658
                  %v660 = vld [vmem:[%s522 + $0x220] sm:$0xff]
                  %661 = vst [vmem:[%s523 + $0x220] sm:$0xff] %v660
                  %v662 = vld [vmem:[%s522 + $0x228] sm:$0xff]
                  %663 = vst [vmem:[%s523 + $0x228] sm:$0xff] %v662
                  %v664 = vld [vmem:[%s522 + $0x230] sm:$0xff]
                  %665 = vst [vmem:[%s523 + $0x230] sm:$0xff] %v664
                  %v666 = vld [vmem:[%s522 + $0x238] sm:$0xff]
                  %667 = vst [vmem:[%s523 + $0x238] sm:$0xff] %v666
                  %v668 = vld [vmem:[%s522 + $0x240] sm:$0xff]
                  %669 = vst [vmem:[%s523 + $0x240] sm:$0xff] %v668
                  %v670 = vld [vmem:[%s522 + $0x248] sm:$0xff]
                  %671 = vst [vmem:[%s523 + $0x248] sm:$0xff] %v670
                  %v672 = vld [vmem:[%s522 + $0x250] sm:$0xff]
                  %673 = vst [vmem:[%s523 + $0x250] sm:$0xff] %v672
                  %v674 = vld [vmem:[%s522 + $0x258] sm:$0xff]
                  %675 = vst [vmem:[%s523 + $0x258] sm:$0xff] %v674
                  %v676 = vld [vmem:[%s522 + $0x260] sm:$0xff]
                  %677 = vst [vmem:[%s523 + $0x260] sm:$0xff] %v676
                  %v678 = vld [vmem:[%s522 + $0x268] sm:$0xff]
                  %679 = vst [vmem:[%s523 + $0x268] sm:$0xff] %v678
                  %v680 = vld [vmem:[%s522 + $0x270] sm:$0xff]
                  %681 = vst [vmem:[%s523 + $0x270] sm:$0xff] %v680
                  %v682 = vld [vmem:[%s522 + $0x278] sm:$0xff]
                  %683 = vst [vmem:[%s523 + $0x278] sm:$0xff] %v682
                  %v684 = vld [vmem:[%s522 + $0x280] sm:$0xff]
                  %685 = vst [vmem:[%s523 + $0x280] sm:$0xff] %v684
                  %v686 = vld [vmem:[%s522 + $0x288] sm:$0xff]
                  %687 = vst [vmem:[%s523 + $0x288] sm:$0xff] %v686
                  %v688 = vld [vmem:[%s522 + $0x290] sm:$0xff]
                  %689 = vst [vmem:[%s523 + $0x290] sm:$0xff] %v688
                  %v690 = vld [vmem:[%s522 + $0x298] sm:$0xff]
                  %691 = vst [vmem:[%s523 + $0x298] sm:$0xff] %v690
                  %v692 = vld [vmem:[%s522 + $0x2a0] sm:$0xff]
                  %693 = vst [vmem:[%s523 + $0x2a0] sm:$0xff] %v692
                  %v694 = vld [vmem:[%s522 + $0x2a8] sm:$0xff]
                  %695 = vst [vmem:[%s523 + $0x2a8] sm:$0xff] %v694
                  %v696 = vld [vmem:[%s522 + $0x2b0] sm:$0xff]
                  %697 = vst [vmem:[%s523 + $0x2b0] sm:$0xff] %v696
                  %v698 = vld [vmem:[%s522 + $0x2b8] sm:$0xff]
                  %699 = vst [vmem:[%s523 + $0x2b8] sm:$0xff] %v698
                  %v700 = vld [vmem:[%s522 + $0x2c0] sm:$0xff]
                  %701 = vst [vmem:[%s523 + $0x2c0] sm:$0xff] %v700
                  %v702 = vld [vmem:[%s522 + $0x2c8] sm:$0xff]
                  %703 = vst [vmem:[%s523 + $0x2c8] sm:$0xff] %v702
                  %v704 = vld [vmem:[%s522 + $0x2d0] sm:$0xff]
                  %705 = vst [vmem:[%s523 + $0x2d0] sm:$0xff] %v704
                  %v706 = vld [vmem:[%s522 + $0x2d8] sm:$0xff]
                  %707 = vst [vmem:[%s523 + $0x2d8] sm:$0xff] %v706
                  %v708 = vld [vmem:[%s522 + $0x2e0] sm:$0xff]
                  %709 = vst [vmem:[%s523 + $0x2e0] sm:$0xff] %v708
                  %v710 = vld [vmem:[%s522 + $0x2e8] sm:$0xff]
                  %711 = vst [vmem:[%s523 + $0x2e8] sm:$0xff] %v710
                  %v712 = vld [vmem:[%s522 + $0x2f0] sm:$0xff]
                  %713 = vst [vmem:[%s523 + $0x2f0] sm:$0xff] %v712
                  %v714 = vld [vmem:[%s522 + $0x2f8] sm:$0xff]
                  %715 = vst [vmem:[%s523 + $0x2f8] sm:$0xff] %v714
                  %v716 = vld [vmem:[%s522 + $0x600] sm:$0xff]
                  %717 = vst [vmem:[%s523 + $0x300] sm:$0xff] %v716
                  %v718 = vld [vmem:[%s522 + $0x608] sm:$0xff]
                  %719 = vst [vmem:[%s523 + $0x308] sm:$0xff] %v718
                  %v720 = vld [vmem:[%s522 + $0x610] sm:$0xff]
                  %721 = vst [vmem:[%s523 + $0x310] sm:$0xff] %v720
                  %v722 = vld [vmem:[%s522 + $0x618] sm:$0xff]
                  %723 = vst [vmem:[%s523 + $0x318] sm:$0xff] %v722
                  %v724 = vld [vmem:[%s522 + $0x620] sm:$0xff]
                  %725 = vst [vmem:[%s523 + $0x320] sm:$0xff] %v724
                  %v726 = vld [vmem:[%s522 + $0x628] sm:$0xff]
                  %727 = vst [vmem:[%s523 + $0x328] sm:$0xff] %v726
                  %v728 = vld [vmem:[%s522 + $0x630] sm:$0xff]
                  %729 = vst [vmem:[%s523 + $0x330] sm:$0xff] %v728
                  %v730 = vld [vmem:[%s522 + $0x638] sm:$0xff]
                  %731 = vst [vmem:[%s523 + $0x338] sm:$0xff] %v730
                  %v732 = vld [vmem:[%s522 + $0x640] sm:$0xff]
                  %733 = vst [vmem:[%s523 + $0x340] sm:$0xff] %v732
                  %v734 = vld [vmem:[%s522 + $0x648] sm:$0xff]
                  %735 = vst [vmem:[%s523 + $0x348] sm:$0xff] %v734
                  %v736 = vld [vmem:[%s522 + $0x650] sm:$0xff]
                  %737 = vst [vmem:[%s523 + $0x350] sm:$0xff] %v736
                  %v738 = vld [vmem:[%s522 + $0x658] sm:$0xff]
                  %739 = vst [vmem:[%s523 + $0x358] sm:$0xff] %v738
                  %v740 = vld [vmem:[%s522 + $0x660] sm:$0xff]
                  %741 = vst [vmem:[%s523 + $0x360] sm:$0xff] %v740
                  %v742 = vld [vmem:[%s522 + $0x668] sm:$0xff]
                  %743 = vst [vmem:[%s523 + $0x368] sm:$0xff] %v742
                  %v744 = vld [vmem:[%s522 + $0x670] sm:$0xff]
                  %745 = vst [vmem:[%s523 + $0x370] sm:$0xff] %v744
                  %v746 = vld [vmem:[%s522 + $0x678] sm:$0xff]
                  %747 = vst [vmem:[%s523 + $0x378] sm:$0xff] %v746
                  %v748 = vld [vmem:[%s522 + $0x680] sm:$0xff]
                  %749 = vst [vmem:[%s523 + $0x380] sm:$0xff] %v748
                  %v750 = vld [vmem:[%s522 + $0x688] sm:$0xff]
                  %751 = vst [vmem:[%s523 + $0x388] sm:$0xff] %v750
                  %v752 = vld [vmem:[%s522 + $0x690] sm:$0xff]
                  %753 = vst [vmem:[%s523 + $0x390] sm:$0xff] %v752
                  %v754 = vld [vmem:[%s522 + $0x698] sm:$0xff]
                  %755 = vst [vmem:[%s523 + $0x398] sm:$0xff] %v754
                  %v756 = vld [vmem:[%s522 + $0x6a0] sm:$0xff]
                  %757 = vst [vmem:[%s523 + $0x3a0] sm:$0xff] %v756
                  %v758 = vld [vmem:[%s522 + $0x6a8] sm:$0xff]
                  %759 = vst [vmem:[%s523 + $0x3a8] sm:$0xff] %v758
                  %v760 = vld [vmem:[%s522 + $0x6b0] sm:$0xff]
                  %761 = vst [vmem:[%s523 + $0x3b0] sm:$0xff] %v760
                  %v762 = vld [vmem:[%s522 + $0x6b8] sm:$0xff]
                  %763 = vst [vmem:[%s523 + $0x3b8] sm:$0xff] %v762
                  %v764 = vld [vmem:[%s522 + $0x6c0] sm:$0xff]
                  %765 = vst [vmem:[%s523 + $0x3c0] sm:$0xff] %v764
                  %v766 = vld [vmem:[%s522 + $0x6c8] sm:$0xff]
                  %767 = vst [vmem:[%s523 + $0x3c8] sm:$0xff] %v766
                  %v768 = vld [vmem:[%s522 + $0x6d0] sm:$0xff]
                  %769 = vst [vmem:[%s523 + $0x3d0] sm:$0xff] %v768
                  %v770 = vld [vmem:[%s522 + $0x6d8] sm:$0xff]
                  %771 = vst [vmem:[%s523 + $0x3d8] sm:$0xff] %v770
                  %v772 = vld [vmem:[%s522 + $0x6e0] sm:$0xff]
                  %773 = vst [vmem:[%s523 + $0x3e0] sm:$0xff] %v772
                  %v774 = vld [vmem:[%s522 + $0x6e8] sm:$0xff]
                  %775 = vst [vmem:[%s523 + $0x3e8] sm:$0xff] %v774
                  %v776 = vld [vmem:[%s522 + $0x6f0] sm:$0xff]
                  %777 = vst [vmem:[%s523 + $0x3f0] sm:$0xff] %v776
                  %v778 = vld [vmem:[%s522 + $0x6f8] sm:$0xff]
                  %779 = vst [vmem:[%s523 + $0x3f8] sm:$0xff] %v778
                  %v780 = vld [vmem:[%s522 + $0x700] sm:$0xff]
                  %781 = vst [vmem:[%s523 + $0x400] sm:$0xff] %v780
                  %v782 = vld [vmem:[%s522 + $0x708] sm:$0xff]
                  %783 = vst [vmem:[%s523 + $0x408] sm:$0xff] %v782
                  %v784 = vld [vmem:[%s522 + $0x710] sm:$0xff]
                  %785 = vst [vmem:[%s523 + $0x410] sm:$0xff] %v784
                  %v786 = vld [vmem:[%s522 + $0x718] sm:$0xff]
                  %787 = vst [vmem:[%s523 + $0x418] sm:$0xff] %v786
                  %v788 = vld [vmem:[%s522 + $0x720] sm:$0xff]
                  %789 = vst [vmem:[%s523 + $0x420] sm:$0xff] %v788
                  %v790 = vld [vmem:[%s522 + $0x728] sm:$0xff]
                  %791 = vst [vmem:[%s523 + $0x428] sm:$0xff] %v790
                  %v792 = vld [vmem:[%s522 + $0x730] sm:$0xff]
                  %793 = vst [vmem:[%s523 + $0x430] sm:$0xff] %v792
                  %v794 = vld [vmem:[%s522 + $0x738] sm:$0xff]
                  %795 = vst [vmem:[%s523 + $0x438] sm:$0xff] %v794
                  %v796 = vld [vmem:[%s522 + $0x740] sm:$0xff]
                  %797 = vst [vmem:[%s523 + $0x440] sm:$0xff] %v796
                  %v798 = vld [vmem:[%s522 + $0x748] sm:$0xff]
                  %799 = vst [vmem:[%s523 + $0x448] sm:$0xff] %v798
                  %v800 = vld [vmem:[%s522 + $0x750] sm:$0xff]
                  %801 = vst [vmem:[%s523 + $0x450] sm:$0xff] %v800
                  %v802 = vld [vmem:[%s522 + $0x758] sm:$0xff]
                  %803 = vst [vmem:[%s523 + $0x458] sm:$0xff] %v802
                  %v804 = vld [vmem:[%s522 + $0x760] sm:$0xff]
                  %805 = vst [vmem:[%s523 + $0x460] sm:$0xff] %v804
                  %v806 = vld [vmem:[%s522 + $0x768] sm:$0xff]
                  %807 = vst [vmem:[%s523 + $0x468] sm:$0xff] %v806
                  %v808 = vld [vmem:[%s522 + $0x770] sm:$0xff]
                  %809 = vst [vmem:[%s523 + $0x470] sm:$0xff] %v808
                  %v810 = vld [vmem:[%s522 + $0x778] sm:$0xff]
                  %811 = vst [vmem:[%s523 + $0x478] sm:$0xff] %v810
                  %v812 = vld [vmem:[%s522 + $0x780] sm:$0xff]
                  %813 = vst [vmem:[%s523 + $0x480] sm:$0xff] %v812
                  %v814 = vld [vmem:[%s522 + $0x788] sm:$0xff]
                  %815 = vst [vmem:[%s523 + $0x488] sm:$0xff] %v814
                  %v816 = vld [vmem:[%s522 + $0x790] sm:$0xff]
                  %817 = vst [vmem:[%s523 + $0x490] sm:$0xff] %v816
                  %v818 = vld [vmem:[%s522 + $0x798] sm:$0xff]
                  %819 = vst [vmem:[%s523 + $0x498] sm:$0xff] %v818
                  %v820 = vld [vmem:[%s522 + $0x7a0] sm:$0xff]
                  %821 = vst [vmem:[%s523 + $0x4a0] sm:$0xff] %v820
                  %v822 = vld [vmem:[%s522 + $0x7a8] sm:$0xff]
                  %823 = vst [vmem:[%s523 + $0x4a8] sm:$0xff] %v822
                  %v824 = vld [vmem:[%s522 + $0x7b0] sm:$0xff]
                  %825 = vst [vmem:[%s523 + $0x4b0] sm:$0xff] %v824
                  %v826 = vld [vmem:[%s522 + $0x7b8] sm:$0xff]
                  %827 = vst [vmem:[%s523 + $0x4b8] sm:$0xff] %v826
                  %v828 = vld [vmem:[%s522 + $0x7c0] sm:$0xff]
                  %829 = vst [vmem:[%s523 + $0x4c0] sm:$0xff] %v828
                  %v830 = vld [vmem:[%s522 + $0x7c8] sm:$0xff]
                  %831 = vst [vmem:[%s523 + $0x4c8] sm:$0xff] %v830
                  %v832 = vld [vmem:[%s522 + $0x7d0] sm:$0xff]
                  %833 = vst [vmem:[%s523 + $0x4d0] sm:$0xff] %v832
                  %v834 = vld [vmem:[%s522 + $0x7d8] sm:$0xff]
                  %835 = vst [vmem:[%s523 + $0x4d8] sm:$0xff] %v834
                  %v836 = vld [vmem:[%s522 + $0x7e0] sm:$0xff]
                  %837 = vst [vmem:[%s523 + $0x4e0] sm:$0xff] %v836
                  %v838 = vld [vmem:[%s522 + $0x7e8] sm:$0xff]
                  %839 = vst [vmem:[%s523 + $0x4e8] sm:$0xff] %v838
                  %v840 = vld [vmem:[%s522 + $0x7f0] sm:$0xff]
                  %841 = vst [vmem:[%s523 + $0x4f0] sm:$0xff] %v840
                  %v842 = vld [vmem:[%s522 + $0x7f8] sm:$0xff]
                  %843 = vst [vmem:[%s523 + $0x4f8] sm:$0xff] %v842
                  %v844 = vld [vmem:[%s522 + $0x800] sm:$0xff]
                  %845 = vst [vmem:[%s523 + $0x500] sm:$0xff] %v844
                  %v846 = vld [vmem:[%s522 + $0x808] sm:$0xff]
                  %847 = vst [vmem:[%s523 + $0x508] sm:$0xff] %v846
                  %v848 = vld [vmem:[%s522 + $0x810] sm:$0xff]
                  %849 = vst [vmem:[%s523 + $0x510] sm:$0xff] %v848
                  %v850 = vld [vmem:[%s522 + $0x818] sm:$0xff]
                  %851 = vst [vmem:[%s523 + $0x518] sm:$0xff] %v850
                  %v852 = vld [vmem:[%s522 + $0x820] sm:$0xff]
                  %853 = vst [vmem:[%s523 + $0x520] sm:$0xff] %v852
                  %v854 = vld [vmem:[%s522 + $0x828] sm:$0xff]
                  %855 = vst [vmem:[%s523 + $0x528] sm:$0xff] %v854
                  %v856 = vld [vmem:[%s522 + $0x830] sm:$0xff]
                  %857 = vst [vmem:[%s523 + $0x530] sm:$0xff] %v856
                  %v858 = vld [vmem:[%s522 + $0x838] sm:$0xff]
                  %859 = vst [vmem:[%s523 + $0x538] sm:$0xff] %v858
                  %v860 = vld [vmem:[%s522 + $0x840] sm:$0xff]
                  %861 = vst [vmem:[%s523 + $0x540] sm:$0xff] %v860
                  %v862 = vld [vmem:[%s522 + $0x848] sm:$0xff]
                  %863 = vst [vmem:[%s523 + $0x548] sm:$0xff] %v862
                  %v864 = vld [vmem:[%s522 + $0x850] sm:$0xff]
                  %865 = vst [vmem:[%s523 + $0x550] sm:$0xff] %v864
                  %v866 = vld [vmem:[%s522 + $0x858] sm:$0xff]
                  %867 = vst [vmem:[%s523 + $0x558] sm:$0xff] %v866
                  %v868 = vld [vmem:[%s522 + $0x860] sm:$0xff]
                  %869 = vst [vmem:[%s523 + $0x560] sm:$0xff] %v868
                  %v870 = vld [vmem:[%s522 + $0x868] sm:$0xff]
                  %871 = vst [vmem:[%s523 + $0x568] sm:$0xff] %v870
                  %v872 = vld [vmem:[%s522 + $0x870] sm:$0xff]
                  %873 = vst [vmem:[%s523 + $0x570] sm:$0xff] %v872
                  %v874 = vld [vmem:[%s522 + $0x878] sm:$0xff]
                  %875 = vst [vmem:[%s523 + $0x578] sm:$0xff] %v874
                  %v876 = vld [vmem:[%s522 + $0x880] sm:$0xff]
                  %877 = vst [vmem:[%s523 + $0x580] sm:$0xff] %v876
                  %v878 = vld [vmem:[%s522 + $0x888] sm:$0xff]
                  %879 = vst [vmem:[%s523 + $0x588] sm:$0xff] %v878
                  %v880 = vld [vmem:[%s522 + $0x890] sm:$0xff]
                  %881 = vst [vmem:[%s523 + $0x590] sm:$0xff] %v880
                  %v882 = vld [vmem:[%s522 + $0x898] sm:$0xff]
                  %883 = vst [vmem:[%s523 + $0x598] sm:$0xff] %v882
                  %v884 = vld [vmem:[%s522 + $0x8a0] sm:$0xff]
                  %885 = vst [vmem:[%s523 + $0x5a0] sm:$0xff] %v884
                  %v886 = vld [vmem:[%s522 + $0x8a8] sm:$0xff]
                  %887 = vst [vmem:[%s523 + $0x5a8] sm:$0xff] %v886
                  %v888 = vld [vmem:[%s522 + $0x8b0] sm:$0xff]
                  %889 = vst [vmem:[%s523 + $0x5b0] sm:$0xff] %v888
                  %v890 = vld [vmem:[%s522 + $0x8b8] sm:$0xff]
                  %891 = vst [vmem:[%s523 + $0x5b8] sm:$0xff] %v890
                  %v892 = vld [vmem:[%s522 + $0x8c0] sm:$0xff]
                  %893 = vst [vmem:[%s523 + $0x5c0] sm:$0xff] %v892
                  %v894 = vld [vmem:[%s522 + $0x8c8] sm:$0xff]
                  %895 = vst [vmem:[%s523 + $0x5c8] sm:$0xff] %v894
                  %v896 = vld [vmem:[%s522 + $0x8d0] sm:$0xff]
                  %897 = vst [vmem:[%s523 + $0x5d0] sm:$0xff] %v896
                  %v898 = vld [vmem:[%s522 + $0x8d8] sm:$0xff]
                  %899 = vst [vmem:[%s523 + $0x5d8] sm:$0xff] %v898
                  %v900 = vld [vmem:[%s522 + $0x8e0] sm:$0xff]
                  %901 = vst [vmem:[%s523 + $0x5e0] sm:$0xff] %v900
                  %v902 = vld [vmem:[%s522 + $0x8e8] sm:$0xff]
                  %903 = vst [vmem:[%s523 + $0x5e8] sm:$0xff] %v902
                  %v904 = vld [vmem:[%s522 + $0x8f0] sm:$0xff]
                  %905 = vst [vmem:[%s523 + $0x5f0] sm:$0xff] %v904
                  %v906 = vld [vmem:[%s522 + $0x8f8] sm:$0xff]
                  %907 = vst [vmem:[%s523 + $0x5f8] sm:$0xff] %v906
                $region48: #{model_forward.1} parent=42 // loop_footer
                  %s521 = sadd.s32 1, %s517
                $region49: #{model_forward.1} parent=42 // loop_footer_branch
                  %516 = sbr.rel target = $region45
                $region50: #{model_forward.1} parent=42 // loop_exit
                  _
              $region43: #{model_forward.1} parent=27 // pred_fallthru
                _
              // Predicated region
              $region51: #{model_forward.1} parent=27 // pred_check
                _
              $region52: #{model_forward.1} parent=27 // pred_check_branch
                %909 = sbr.rel target = $region54
              $region53: #{model_forward.1} parent=27 // pred_region
                _
              $region54: #{model_forward.1} parent=27 // pred_fallthru
                _
            $region28: #{model_forward.1} parent=23 // pred_fallthru
              _
            // Predicated region
            $region29: #{model_forward.1} parent=23 // pred_check
              _
            $region30: #{model_forward.1} parent=23 // pred_check_branch
              %120 = sbr.rel target = $region32
            $region31: #{model_forward.1} parent=23 // pred_region
              loop: start=0, step=1, limit=1
              $region33: #{model_forward.1} parent=31 // loop_pre_header
                _
              $region34: #{model_forward.1} parent=31 // loop_header
                %s123 = sphi 0, %s127
                %p124 = scmp.ge.s32.totalorder %s123, 1
                %s128 = sphi %s114, %s114
                %s129 = sphi %s111, %s111
              $region35: #{model_forward.1} parent=31 // loop_header_branch
                %126 = sbr.rel (%p124) target = $region39
              $region36: #{model_forward.1} parent=31 // loop_body
                %v130 = vld [vmem:[%s128] sm:$0xff]
                %131 = vst [vmem:[%s129] sm:$0xff] %v130
                %v132 = vld [vmem:[%s128 + $0x8] sm:$0xff]
                %133 = vst [vmem:[%s129 + $0x8] sm:$0xff] %v132
                %v134 = vld [vmem:[%s128 + $0x10] sm:$0xff]
                %135 = vst [vmem:[%s129 + $0x10] sm:$0xff] %v134
                %v136 = vld [vmem:[%s128 + $0x18] sm:$0xff]
                %137 = vst [vmem:[%s129 + $0x18] sm:$0xff] %v136
                %v138 = vld [vmem:[%s128 + $0x20] sm:$0xff]
                %139 = vst [vmem:[%s129 + $0x20] sm:$0xff] %v138
                %v140 = vld [vmem:[%s128 + $0x28] sm:$0xff]
                %141 = vst [vmem:[%s129 + $0x28] sm:$0xff] %v140
                %v142 = vld [vmem:[%s128 + $0x30] sm:$0xff]
                %143 = vst [vmem:[%s129 + $0x30] sm:$0xff] %v142
                %v144 = vld [vmem:[%s128 + $0x38] sm:$0xff]
                %145 = vst [vmem:[%s129 + $0x38] sm:$0xff] %v144
                %v146 = vld [vmem:[%s128 + $0x40] sm:$0xff]
                %147 = vst [vmem:[%s129 + $0x40] sm:$0xff] %v146
                %v148 = vld [vmem:[%s128 + $0x48] sm:$0xff]
                %149 = vst [vmem:[%s129 + $0x48] sm:$0xff] %v148
                %v150 = vld [vmem:[%s128 + $0x50] sm:$0xff]
                %151 = vst [vmem:[%s129 + $0x50] sm:$0xff] %v150
                %v152 = vld [vmem:[%s128 + $0x58] sm:$0xff]
                %153 = vst [vmem:[%s129 + $0x58] sm:$0xff] %v152
                %v154 = vld [vmem:[%s128 + $0x60] sm:$0xff]
                %155 = vst [vmem:[%s129 + $0x60] sm:$0xff] %v154
                %v156 = vld [vmem:[%s128 + $0x68] sm:$0xff]
                %157 = vst [vmem:[%s129 + $0x68] sm:$0xff] %v156
                %v158 = vld [vmem:[%s128 + $0x70] sm:$0xff]
                %159 = vst [vmem:[%s129 + $0x70] sm:$0xff] %v158
                %v160 = vld [vmem:[%s128 + $0x78] sm:$0xff]
                %161 = vst [vmem:[%s129 + $0x78] sm:$0xff] %v160
                %v162 = vld [vmem:[%s128 + $0x80] sm:$0xff]
                %163 = vst [vmem:[%s129 + $0x80] sm:$0xff] %v162
                %v164 = vld [vmem:[%s128 + $0x88] sm:$0xff]
                %165 = vst [vmem:[%s129 + $0x88] sm:$0xff] %v164
                %v166 = vld [vmem:[%s128 + $0x90] sm:$0xff]
                %167 = vst [vmem:[%s129 + $0x90] sm:$0xff] %v166
                %v168 = vld [vmem:[%s128 + $0x98] sm:$0xff]
                %169 = vst [vmem:[%s129 + $0x98] sm:$0xff] %v168
                %v170 = vld [vmem:[%s128 + $0xa0] sm:$0xff]
                %171 = vst [vmem:[%s129 + $0xa0] sm:$0xff] %v170
                %v172 = vld [vmem:[%s128 + $0xa8] sm:$0xff]
                %173 = vst [vmem:[%s129 + $0xa8] sm:$0xff] %v172
                %v174 = vld [vmem:[%s128 + $0xb0] sm:$0xff]
                %175 = vst [vmem:[%s129 + $0xb0] sm:$0xff] %v174
                %v176 = vld [vmem:[%s128 + $0xb8] sm:$0xff]
                %177 = vst [vmem:[%s129 + $0xb8] sm:$0xff] %v176
                %v178 = vld [vmem:[%s128 + $0xc0] sm:$0xff]
                %179 = vst [vmem:[%s129 + $0xc0] sm:$0xff] %v178
                %v180 = vld [vmem:[%s128 + $0xc8] sm:$0xff]
                %181 = vst [vmem:[%s129 + $0xc8] sm:$0xff] %v180
                %v182 = vld [vmem:[%s128 + $0xd0] sm:$0xff]
                %183 = vst [vmem:[%s129 + $0xd0] sm:$0xff] %v182
                %v184 = vld [vmem:[%s128 + $0xd8] sm:$0xff]
                %185 = vst [vmem:[%s129 + $0xd8] sm:$0xff] %v184
                %v186 = vld [vmem:[%s128 + $0xe0] sm:$0xff]
                %187 = vst [vmem:[%s129 + $0xe0] sm:$0xff] %v186
                %v188 = vld [vmem:[%s128 + $0xe8] sm:$0xff]
                %189 = vst [vmem:[%s129 + $0xe8] sm:$0xff] %v188
                %v190 = vld [vmem:[%s128 + $0xf0] sm:$0xff]
                %191 = vst [vmem:[%s129 + $0xf0] sm:$0xff] %v190
                %v192 = vld [vmem:[%s128 + $0xf8] sm:$0xff]
                %193 = vst [vmem:[%s129 + $0xf8] sm:$0xff] %v192
                %v194 = vld [vmem:[%s128 + $0x100] sm:$0xff]
                %195 = vst [vmem:[%s129 + $0x100] sm:$0xff] %v194
                %v196 = vld [vmem:[%s128 + $0x108] sm:$0xff]
                %197 = vst [vmem:[%s129 + $0x108] sm:$0xff] %v196
                %v198 = vld [vmem:[%s128 + $0x110] sm:$0xff]
                %199 = vst [vmem:[%s129 + $0x110] sm:$0xff] %v198
                %v200 = vld [vmem:[%s128 + $0x118] sm:$0xff]
                %201 = vst [vmem:[%s129 + $0x118] sm:$0xff] %v200
                %v202 = vld [vmem:[%s128 + $0x120] sm:$0xff]
                %203 = vst [vmem:[%s129 + $0x120] sm:$0xff] %v202
                %v204 = vld [vmem:[%s128 + $0x128] sm:$0xff]
                %205 = vst [vmem:[%s129 + $0x128] sm:$0xff] %v204
                %v206 = vld [vmem:[%s128 + $0x130] sm:$0xff]
                %207 = vst [vmem:[%s129 + $0x130] sm:$0xff] %v206
                %v208 = vld [vmem:[%s128 + $0x138] sm:$0xff]
                %209 = vst [vmem:[%s129 + $0x138] sm:$0xff] %v208
                %v210 = vld [vmem:[%s128 + $0x140] sm:$0xff]
                %211 = vst [vmem:[%s129 + $0x140] sm:$0xff] %v210
                %v212 = vld [vmem:[%s128 + $0x148] sm:$0xff]
                %213 = vst [vmem:[%s129 + $0x148] sm:$0xff] %v212
                %v214 = vld [vmem:[%s128 + $0x150] sm:$0xff]
                %215 = vst [vmem:[%s129 + $0x150] sm:$0xff] %v214
                %v216 = vld [vmem:[%s128 + $0x158] sm:$0xff]
                %217 = vst [vmem:[%s129 + $0x158] sm:$0xff] %v216
                %v218 = vld [vmem:[%s128 + $0x160] sm:$0xff]
                %219 = vst [vmem:[%s129 + $0x160] sm:$0xff] %v218
                %v220 = vld [vmem:[%s128 + $0x168] sm:$0xff]
                %221 = vst [vmem:[%s129 + $0x168] sm:$0xff] %v220
                %v222 = vld [vmem:[%s128 + $0x170] sm:$0xff]
                %223 = vst [vmem:[%s129 + $0x170] sm:$0xff] %v222
                %v224 = vld [vmem:[%s128 + $0x178] sm:$0xff]
                %225 = vst [vmem:[%s129 + $0x178] sm:$0xff] %v224
                %v226 = vld [vmem:[%s128 + $0x180] sm:$0xff]
                %227 = vst [vmem:[%s129 + $0x180] sm:$0xff] %v226
                %v228 = vld [vmem:[%s128 + $0x188] sm:$0xff]
                %229 = vst [vmem:[%s129 + $0x188] sm:$0xff] %v228
                %v230 = vld [vmem:[%s128 + $0x190] sm:$0xff]
                %231 = vst [vmem:[%s129 + $0x190] sm:$0xff] %v230
                %v232 = vld [vmem:[%s128 + $0x198] sm:$0xff]
                %233 = vst [vmem:[%s129 + $0x198] sm:$0xff] %v232
                %v234 = vld [vmem:[%s128 + $0x1a0] sm:$0xff]
                %235 = vst [vmem:[%s129 + $0x1a0] sm:$0xff] %v234
                %v236 = vld [vmem:[%s128 + $0x1a8] sm:$0xff]
                %237 = vst [vmem:[%s129 + $0x1a8] sm:$0xff] %v236
                %v238 = vld [vmem:[%s128 + $0x1b0] sm:$0xff]
                %239 = vst [vmem:[%s129 + $0x1b0] sm:$0xff] %v238
                %v240 = vld [vmem:[%s128 + $0x1b8] sm:$0xff]
                %241 = vst [vmem:[%s129 + $0x1b8] sm:$0xff] %v240
                %v242 = vld [vmem:[%s128 + $0x1c0] sm:$0xff]
                %243 = vst [vmem:[%s129 + $0x1c0] sm:$0xff] %v242
                %v244 = vld [vmem:[%s128 + $0x1c8] sm:$0xff]
                %245 = vst [vmem:[%s129 + $0x1c8] sm:$0xff] %v244
                %v246 = vld [vmem:[%s128 + $0x1d0] sm:$0xff]
                %247 = vst [vmem:[%s129 + $0x1d0] sm:$0xff] %v246
                %v248 = vld [vmem:[%s128 + $0x1d8] sm:$0xff]
                %249 = vst [vmem:[%s129 + $0x1d8] sm:$0xff] %v248
                %v250 = vld [vmem:[%s128 + $0x1e0] sm:$0xff]
                %251 = vst [vmem:[%s129 + $0x1e0] sm:$0xff] %v250
                %v252 = vld [vmem:[%s128 + $0x1e8] sm:$0xff]
                %253 = vst [vmem:[%s129 + $0x1e8] sm:$0xff] %v252
                %v254 = vld [vmem:[%s128 + $0x1f0] sm:$0xff]
                %255 = vst [vmem:[%s129 + $0x1f0] sm:$0xff] %v254
                %v256 = vld [vmem:[%s128 + $0x1f8] sm:$0xff]
                %257 = vst [vmem:[%s129 + $0x1f8] sm:$0xff] %v256
                %v258 = vld [vmem:[%s128 + $0x200] sm:$0xff]
                %259 = vst [vmem:[%s129 + $0x200] sm:$0xff] %v258
                %v260 = vld [vmem:[%s128 + $0x208] sm:$0xff]
                %261 = vst [vmem:[%s129 + $0x208] sm:$0xff] %v260
                %v262 = vld [vmem:[%s128 + $0x210] sm:$0xff]
                %263 = vst [vmem:[%s129 + $0x210] sm:$0xff] %v262
                %v264 = vld [vmem:[%s128 + $0x218] sm:$0xff]
                %265 = vst [vmem:[%s129 + $0x218] sm:$0xff] %v264
                %v266 = vld [vmem:[%s128 + $0x220] sm:$0xff]
                %267 = vst [vmem:[%s129 + $0x220] sm:$0xff] %v266
                %v268 = vld [vmem:[%s128 + $0x228] sm:$0xff]
                %269 = vst [vmem:[%s129 + $0x228] sm:$0xff] %v268
                %v270 = vld [vmem:[%s128 + $0x230] sm:$0xff]
                %271 = vst [vmem:[%s129 + $0x230] sm:$0xff] %v270
                %v272 = vld [vmem:[%s128 + $0x238] sm:$0xff]
                %273 = vst [vmem:[%s129 + $0x238] sm:$0xff] %v272
                %v274 = vld [vmem:[%s128 + $0x240] sm:$0xff]
                %275 = vst [vmem:[%s129 + $0x240] sm:$0xff] %v274
                %v276 = vld [vmem:[%s128 + $0x248] sm:$0xff]
                %277 = vst [vmem:[%s129 + $0x248] sm:$0xff] %v276
                %v278 = vld [vmem:[%s128 + $0x250] sm:$0xff]
                %279 = vst [vmem:[%s129 + $0x250] sm:$0xff] %v278
                %v280 = vld [vmem:[%s128 + $0x258] sm:$0xff]
                %281 = vst [vmem:[%s129 + $0x258] sm:$0xff] %v280
                %v282 = vld [vmem:[%s128 + $0x260] sm:$0xff]
                %283 = vst [vmem:[%s129 + $0x260] sm:$0xff] %v282
                %v284 = vld [vmem:[%s128 + $0x268] sm:$0xff]
                %285 = vst [vmem:[%s129 + $0x268] sm:$0xff] %v284
                %v286 = vld [vmem:[%s128 + $0x270] sm:$0xff]
                %287 = vst [vmem:[%s129 + $0x270] sm:$0xff] %v286
                %v288 = vld [vmem:[%s128 + $0x278] sm:$0xff]
                %289 = vst [vmem:[%s129 + $0x278] sm:$0xff] %v288
                %v290 = vld [vmem:[%s128 + $0x280] sm:$0xff]
                %291 = vst [vmem:[%s129 + $0x280] sm:$0xff] %v290
                %v292 = vld [vmem:[%s128 + $0x288] sm:$0xff]
                %293 = vst [vmem:[%s129 + $0x288] sm:$0xff] %v292
                %v294 = vld [vmem:[%s128 + $0x290] sm:$0xff]
                %295 = vst [vmem:[%s129 + $0x290] sm:$0xff] %v294
                %v296 = vld [vmem:[%s128 + $0x298] sm:$0xff]
                %297 = vst [vmem:[%s129 + $0x298] sm:$0xff] %v296
                %v298 = vld [vmem:[%s128 + $0x2a0] sm:$0xff]
                %299 = vst [vmem:[%s129 + $0x2a0] sm:$0xff] %v298
                %v300 = vld [vmem:[%s128 + $0x2a8] sm:$0xff]
                %301 = vst [vmem:[%s129 + $0x2a8] sm:$0xff] %v300
                %v302 = vld [vmem:[%s128 + $0x2b0] sm:$0xff]
                %303 = vst [vmem:[%s129 + $0x2b0] sm:$0xff] %v302
                %v304 = vld [vmem:[%s128 + $0x2b8] sm:$0xff]
                %305 = vst [vmem:[%s129 + $0x2b8] sm:$0xff] %v304
                %v306 = vld [vmem:[%s128 + $0x2c0] sm:$0xff]
                %307 = vst [vmem:[%s129 + $0x2c0] sm:$0xff] %v306
                %v308 = vld [vmem:[%s128 + $0x2c8] sm:$0xff]
                %309 = vst [vmem:[%s129 + $0x2c8] sm:$0xff] %v308
                %v310 = vld [vmem:[%s128 + $0x2d0] sm:$0xff]
                %311 = vst [vmem:[%s129 + $0x2d0] sm:$0xff] %v310
                %v312 = vld [vmem:[%s128 + $0x2d8] sm:$0xff]
                %313 = vst [vmem:[%s129 + $0x2d8] sm:$0xff] %v312
                %v314 = vld [vmem:[%s128 + $0x2e0] sm:$0xff]
                %315 = vst [vmem:[%s129 + $0x2e0] sm:$0xff] %v314
                %v316 = vld [vmem:[%s128 + $0x2e8] sm:$0xff]
                %317 = vst [vmem:[%s129 + $0x2e8] sm:$0xff] %v316
                %v318 = vld [vmem:[%s128 + $0x2f0] sm:$0xff]
                %319 = vst [vmem:[%s129 + $0x2f0] sm:$0xff] %v318
                %v320 = vld [vmem:[%s128 + $0x2f8] sm:$0xff]
                %321 = vst [vmem:[%s129 + $0x2f8] sm:$0xff] %v320
                %v322 = vld [vmem:[%s128 + $0x600] sm:$0xff]
                %323 = vst [vmem:[%s129 + $0x300] sm:$0xff] %v322
                %v324 = vld [vmem:[%s128 + $0x608] sm:$0xff]
                %325 = vst [vmem:[%s129 + $0x308] sm:$0xff] %v324
                %v326 = vld [vmem:[%s128 + $0x610] sm:$0xff]
                %327 = vst [vmem:[%s129 + $0x310] sm:$0xff] %v326
                %v328 = vld [vmem:[%s128 + $0x618] sm:$0xff]
                %329 = vst [vmem:[%s129 + $0x318] sm:$0xff] %v328
                %v330 = vld [vmem:[%s128 + $0x620] sm:$0xff]
                %331 = vst [vmem:[%s129 + $0x320] sm:$0xff] %v330
                %v332 = vld [vmem:[%s128 + $0x628] sm:$0xff]
                %333 = vst [vmem:[%s129 + $0x328] sm:$0xff] %v332
                %v334 = vld [vmem:[%s128 + $0x630] sm:$0xff]
                %335 = vst [vmem:[%s129 + $0x330] sm:$0xff] %v334
                %v336 = vld [vmem:[%s128 + $0x638] sm:$0xff]
                %337 = vst [vmem:[%s129 + $0x338] sm:$0xff] %v336
                %v338 = vld [vmem:[%s128 + $0x640] sm:$0xff]
                %339 = vst [vmem:[%s129 + $0x340] sm:$0xff] %v338
                %v340 = vld [vmem:[%s128 + $0x648] sm:$0xff]
                %341 = vst [vmem:[%s129 + $0x348] sm:$0xff] %v340
                %v342 = vld [vmem:[%s128 + $0x650] sm:$0xff]
                %343 = vst [vmem:[%s129 + $0x350] sm:$0xff] %v342
                %v344 = vld [vmem:[%s128 + $0x658] sm:$0xff]
                %345 = vst [vmem:[%s129 + $0x358] sm:$0xff] %v344
                %v346 = vld [vmem:[%s128 + $0x660] sm:$0xff]
                %347 = vst [vmem:[%s129 + $0x360] sm:$0xff] %v346
                %v348 = vld [vmem:[%s128 + $0x668] sm:$0xff]
                %349 = vst [vmem:[%s129 + $0x368] sm:$0xff] %v348
                %v350 = vld [vmem:[%s128 + $0x670] sm:$0xff]
                %351 = vst [vmem:[%s129 + $0x370] sm:$0xff] %v350
                %v352 = vld [vmem:[%s128 + $0x678] sm:$0xff]
                %353 = vst [vmem:[%s129 + $0x378] sm:$0xff] %v352
                %v354 = vld [vmem:[%s128 + $0x680] sm:$0xff]
                %355 = vst [vmem:[%s129 + $0x380] sm:$0xff] %v354
                %v356 = vld [vmem:[%s128 + $0x688] sm:$0xff]
                %357 = vst [vmem:[%s129 + $0x388] sm:$0xff] %v356
                %v358 = vld [vmem:[%s128 + $0x690] sm:$0xff]
                %359 = vst [vmem:[%s129 + $0x390] sm:$0xff] %v358
                %v360 = vld [vmem:[%s128 + $0x698] sm:$0xff]
                %361 = vst [vmem:[%s129 + $0x398] sm:$0xff] %v360
                %v362 = vld [vmem:[%s128 + $0x6a0] sm:$0xff]
                %363 = vst [vmem:[%s129 + $0x3a0] sm:$0xff] %v362
                %v364 = vld [vmem:[%s128 + $0x6a8] sm:$0xff]
                %365 = vst [vmem:[%s129 + $0x3a8] sm:$0xff] %v364
                %v366 = vld [vmem:[%s128 + $0x6b0] sm:$0xff]
                %367 = vst [vmem:[%s129 + $0x3b0] sm:$0xff] %v366
                %v368 = vld [vmem:[%s128 + $0x6b8] sm:$0xff]
                %369 = vst [vmem:[%s129 + $0x3b8] sm:$0xff] %v368
                %v370 = vld [vmem:[%s128 + $0x6c0] sm:$0xff]
                %371 = vst [vmem:[%s129 + $0x3c0] sm:$0xff] %v370
                %v372 = vld [vmem:[%s128 + $0x6c8] sm:$0xff]
                %373 = vst [vmem:[%s129 + $0x3c8] sm:$0xff] %v372
                %v374 = vld [vmem:[%s128 + $0x6d0] sm:$0xff]
                %375 = vst [vmem:[%s129 + $0x3d0] sm:$0xff] %v374
                %v376 = vld [vmem:[%s128 + $0x6d8] sm:$0xff]
                %377 = vst [vmem:[%s129 + $0x3d8] sm:$0xff] %v376
                %v378 = vld [vmem:[%s128 + $0x6e0] sm:$0xff]
                %379 = vst [vmem:[%s129 + $0x3e0] sm:$0xff] %v378
                %v380 = vld [vmem:[%s128 + $0x6e8] sm:$0xff]
                %381 = vst [vmem:[%s129 + $0x3e8] sm:$0xff] %v380
                %v382 = vld [vmem:[%s128 + $0x6f0] sm:$0xff]
                %383 = vst [vmem:[%s129 + $0x3f0] sm:$0xff] %v382
                %v384 = vld [vmem:[%s128 + $0x6f8] sm:$0xff]
                %385 = vst [vmem:[%s129 + $0x3f8] sm:$0xff] %v384
                %v386 = vld [vmem:[%s128 + $0x700] sm:$0xff]
                %387 = vst [vmem:[%s129 + $0x400] sm:$0xff] %v386
                %v388 = vld [vmem:[%s128 + $0x708] sm:$0xff]
                %389 = vst [vmem:[%s129 + $0x408] sm:$0xff] %v388
                %v390 = vld [vmem:[%s128 + $0x710] sm:$0xff]
                %391 = vst [vmem:[%s129 + $0x410] sm:$0xff] %v390
                %v392 = vld [vmem:[%s128 + $0x718] sm:$0xff]
                %393 = vst [vmem:[%s129 + $0x418] sm:$0xff] %v392
                %v394 = vld [vmem:[%s128 + $0x720] sm:$0xff]
                %395 = vst [vmem:[%s129 + $0x420] sm:$0xff] %v394
                %v396 = vld [vmem:[%s128 + $0x728] sm:$0xff]
                %397 = vst [vmem:[%s129 + $0x428] sm:$0xff] %v396
                %v398 = vld [vmem:[%s128 + $0x730] sm:$0xff]
                %399 = vst [vmem:[%s129 + $0x430] sm:$0xff] %v398
                %v400 = vld [vmem:[%s128 + $0x738] sm:$0xff]
                %401 = vst [vmem:[%s129 + $0x438] sm:$0xff] %v400
                %v402 = vld [vmem:[%s128 + $0x740] sm:$0xff]
                %403 = vst [vmem:[%s129 + $0x440] sm:$0xff] %v402
                %v404 = vld [vmem:[%s128 + $0x748] sm:$0xff]
                %405 = vst [vmem:[%s129 + $0x448] sm:$0xff] %v404
                %v406 = vld [vmem:[%s128 + $0x750] sm:$0xff]
                %407 = vst [vmem:[%s129 + $0x450] sm:$0xff] %v406
                %v408 = vld [vmem:[%s128 + $0x758] sm:$0xff]
                %409 = vst [vmem:[%s129 + $0x458] sm:$0xff] %v408
                %v410 = vld [vmem:[%s128 + $0x760] sm:$0xff]
                %411 = vst [vmem:[%s129 + $0x460] sm:$0xff] %v410
                %v412 = vld [vmem:[%s128 + $0x768] sm:$0xff]
                %413 = vst [vmem:[%s129 + $0x468] sm:$0xff] %v412
                %v414 = vld [vmem:[%s128 + $0x770] sm:$0xff]
                %415 = vst [vmem:[%s129 + $0x470] sm:$0xff] %v414
                %v416 = vld [vmem:[%s128 + $0x778] sm:$0xff]
                %417 = vst [vmem:[%s129 + $0x478] sm:$0xff] %v416
                %v418 = vld [vmem:[%s128 + $0x780] sm:$0xff]
                %419 = vst [vmem:[%s129 + $0x480] sm:$0xff] %v418
                %v420 = vld [vmem:[%s128 + $0x788] sm:$0xff]
                %421 = vst [vmem:[%s129 + $0x488] sm:$0xff] %v420
                %v422 = vld [vmem:[%s128 + $0x790] sm:$0xff]
                %423 = vst [vmem:[%s129 + $0x490] sm:$0xff] %v422
                %v424 = vld [vmem:[%s128 + $0x798] sm:$0xff]
                %425 = vst [vmem:[%s129 + $0x498] sm:$0xff] %v424
                %v426 = vld [vmem:[%s128 + $0x7a0] sm:$0xff]
                %427 = vst [vmem:[%s129 + $0x4a0] sm:$0xff] %v426
                %v428 = vld [vmem:[%s128 + $0x7a8] sm:$0xff]
                %429 = vst [vmem:[%s129 + $0x4a8] sm:$0xff] %v428
                %v430 = vld [vmem:[%s128 + $0x7b0] sm:$0xff]
                %431 = vst [vmem:[%s129 + $0x4b0] sm:$0xff] %v430
                %v432 = vld [vmem:[%s128 + $0x7b8] sm:$0xff]
                %433 = vst [vmem:[%s129 + $0x4b8] sm:$0xff] %v432
                %v434 = vld [vmem:[%s128 + $0x7c0] sm:$0xff]
                %435 = vst [vmem:[%s129 + $0x4c0] sm:$0xff] %v434
                %v436 = vld [vmem:[%s128 + $0x7c8] sm:$0xff]
                %437 = vst [vmem:[%s129 + $0x4c8] sm:$0xff] %v436
                %v438 = vld [vmem:[%s128 + $0x7d0] sm:$0xff]
                %439 = vst [vmem:[%s129 + $0x4d0] sm:$0xff] %v438
                %v440 = vld [vmem:[%s128 + $0x7d8] sm:$0xff]
                %441 = vst [vmem:[%s129 + $0x4d8] sm:$0xff] %v440
                %v442 = vld [vmem:[%s128 + $0x7e0] sm:$0xff]
                %443 = vst [vmem:[%s129 + $0x4e0] sm:$0xff] %v442
                %v444 = vld [vmem:[%s128 + $0x7e8] sm:$0xff]
                %445 = vst [vmem:[%s129 + $0x4e8] sm:$0xff] %v444
                %v446 = vld [vmem:[%s128 + $0x7f0] sm:$0xff]
                %447 = vst [vmem:[%s129 + $0x4f0] sm:$0xff] %v446
                %v448 = vld [vmem:[%s128 + $0x7f8] sm:$0xff]
                %449 = vst [vmem:[%s129 + $0x4f8] sm:$0xff] %v448
                %v450 = vld [vmem:[%s128 + $0x800] sm:$0xff]
                %451 = vst [vmem:[%s129 + $0x500] sm:$0xff] %v450
                %v452 = vld [vmem:[%s128 + $0x808] sm:$0xff]
                %453 = vst [vmem:[%s129 + $0x508] sm:$0xff] %v452
                %v454 = vld [vmem:[%s128 + $0x810] sm:$0xff]
                %455 = vst [vmem:[%s129 + $0x510] sm:$0xff] %v454
                %v456 = vld [vmem:[%s128 + $0x818] sm:$0xff]
                %457 = vst [vmem:[%s129 + $0x518] sm:$0xff] %v456
                %v458 = vld [vmem:[%s128 + $0x820] sm:$0xff]
                %459 = vst [vmem:[%s129 + $0x520] sm:$0xff] %v458
                %v460 = vld [vmem:[%s128 + $0x828] sm:$0xff]
                %461 = vst [vmem:[%s129 + $0x528] sm:$0xff] %v460
                %v462 = vld [vmem:[%s128 + $0x830] sm:$0xff]
                %463 = vst [vmem:[%s129 + $0x530] sm:$0xff] %v462
                %v464 = vld [vmem:[%s128 + $0x838] sm:$0xff]
                %465 = vst [vmem:[%s129 + $0x538] sm:$0xff] %v464
                %v466 = vld [vmem:[%s128 + $0x840] sm:$0xff]
                %467 = vst [vmem:[%s129 + $0x540] sm:$0xff] %v466
                %v468 = vld [vmem:[%s128 + $0x848] sm:$0xff]
                %469 = vst [vmem:[%s129 + $0x548] sm:$0xff] %v468
                %v470 = vld [vmem:[%s128 + $0x850] sm:$0xff]
                %471 = vst [vmem:[%s129 + $0x550] sm:$0xff] %v470
                %v472 = vld [vmem:[%s128 + $0x858] sm:$0xff]
                %473 = vst [vmem:[%s129 + $0x558] sm:$0xff] %v472
                %v474 = vld [vmem:[%s128 + $0x860] sm:$0xff]
                %475 = vst [vmem:[%s129 + $0x560] sm:$0xff] %v474
                %v476 = vld [vmem:[%s128 + $0x868] sm:$0xff]
                %477 = vst [vmem:[%s129 + $0x568] sm:$0xff] %v476
                %v478 = vld [vmem:[%s128 + $0x870] sm:$0xff]
                %479 = vst [vmem:[%s129 + $0x570] sm:$0xff] %v478
                %v480 = vld [vmem:[%s128 + $0x878] sm:$0xff]
                %481 = vst [vmem:[%s129 + $0x578] sm:$0xff] %v480
                %v482 = vld [vmem:[%s128 + $0x880] sm:$0xff]
                %483 = vst [vmem:[%s129 + $0x580] sm:$0xff] %v482
                %v484 = vld [vmem:[%s128 + $0x888] sm:$0xff]
                %485 = vst [vmem:[%s129 + $0x588] sm:$0xff] %v484
                %v486 = vld [vmem:[%s128 + $0x890] sm:$0xff]
                %487 = vst [vmem:[%s129 + $0x590] sm:$0xff] %v486
                %v488 = vld [vmem:[%s128 + $0x898] sm:$0xff]
                %489 = vst [vmem:[%s129 + $0x598] sm:$0xff] %v488
                %v490 = vld [vmem:[%s128 + $0x8a0] sm:$0xff]
                %491 = vst [vmem:[%s129 + $0x5a0] sm:$0xff] %v490
                %v492 = vld [vmem:[%s128 + $0x8a8] sm:$0xff]
                %493 = vst [vmem:[%s129 + $0x5a8] sm:$0xff] %v492
                %v494 = vld [vmem:[%s128 + $0x8b0] sm:$0xff]
                %495 = vst [vmem:[%s129 + $0x5b0] sm:$0xff] %v494
                %v496 = vld [vmem:[%s128 + $0x8b8] sm:$0xff]
                %497 = vst [vmem:[%s129 + $0x5b8] sm:$0xff] %v496
                %v498 = vld [vmem:[%s128 + $0x8c0] sm:$0xff]
                %499 = vst [vmem:[%s129 + $0x5c0] sm:$0xff] %v498
                %v500 = vld [vmem:[%s128 + $0x8c8] sm:$0xff]
                %501 = vst [vmem:[%s129 + $0x5c8] sm:$0xff] %v500
                %v502 = vld [vmem:[%s128 + $0x8d0] sm:$0xff]
                %503 = vst [vmem:[%s129 + $0x5d0] sm:$0xff] %v502
                %v504 = vld [vmem:[%s128 + $0x8d8] sm:$0xff]
                %505 = vst [vmem:[%s129 + $0x5d8] sm:$0xff] %v504
                %v506 = vld [vmem:[%s128 + $0x8e0] sm:$0xff]
                %507 = vst [vmem:[%s129 + $0x5e0] sm:$0xff] %v506
                %v508 = vld [vmem:[%s128 + $0x8e8] sm:$0xff]
                %509 = vst [vmem:[%s129 + $0x5e8] sm:$0xff] %v508
                %v510 = vld [vmem:[%s128 + $0x8f0] sm:$0xff]
                %511 = vst [vmem:[%s129 + $0x5f0] sm:$0xff] %v510
                %v512 = vld [vmem:[%s128 + $0x8f8] sm:$0xff]
                %513 = vst [vmem:[%s129 + $0x5f8] sm:$0xff] %v512
              $region37: #{model_forward.1} parent=31 // loop_footer
                %s127 = sadd.s32 1, %s123
              $region38: #{model_forward.1} parent=31 // loop_footer_branch
                %122 = sbr.rel target = $region34
              $region39: #{model_forward.1} parent=31 // loop_exit
                _
            $region32: #{model_forward.1} parent=23 // pred_fallthru
              _
          $region24: #{model_forward.1} parent=19 // pred_fallthru
            _
          %910 = vnop
        $region20: #{model_forward.1} parent=15 // pred_fallthru
          _
        // Predicated region
        $region55: #{model_forward.1} parent=15 // pred_check
          %p911 = pneg %p54
        $region56: #{model_forward.1} parent=15 // pred_check_branch
          %913 = sbr.rel (%p911) target = $region58
        $region57: #{model_forward.1} parent=15 // pred_region
          %s914 = smul.u32 96, %s8
          %p915 = scmp.lt.s32.totalorder %s914, 191
          %s916 = scalar_select %p915, %s914, 191
          %s917 = smul.addr %s916, 8
          %s918 = scalar_lea.vmem %s1, %s917
          %s919 = smul.u32 96, %s8
        $region58: #{model_forward.1} parent=15 // pred_fallthru
          _
      $region16: #{model_forward.1} parent=5 // pred_fallthru
        _
      %p920 = scmp.le.s32.totalorder 1, %s8
      %p921 = scmp.lt.s32.totalorder %s8, 3
      %p922 = pnand %p920, %p921
      %p923 = pneg %p922
      // Predicated region
      $region59: #{model_forward.1} parent=5 // pred_check
        _
      $region60: #{model_forward.1} parent=5 // pred_check_branch
        %925 = sbr.rel (%p922) target = $region62
      $region61: #{model_forward.1} parent=5 // pred_region
        %s926 = ssub.s32 %s8, 1
        %s927 = sand.u32 %s21, 1
        %s928 = sand.u32 %s21, 1
        %s929 = smul.addr %s928, 1536
        %s930 = scalar_lea.vmem [#allocation2], %s929
        // Predicated region
        $region63: #{model_forward.1} parent=61 // pred_check
          %p931 = pneg %p34
        $region64: #{model_forward.1} parent=61 // pred_check_branch
          %933 = sbr.rel (%p931) target = $region66
        $region65: #{model_forward.1} parent=61 // pred_region
          _
        $region66: #{model_forward.1} parent=61 // pred_fallthru
          _
        %s934 = sand.u32 %s21, 1
        %s935 = sand.u32 %s21, 1
        %s936 = smul.addr %s935, 1536
        %s937 = scalar_lea.vmem [#allocation2], %s936
        %p938 = pneg %p34
        %p939 = pneg %p31
        %s940 = smul.u32 96, %s13
        %p941 = scmp.lt.s32.totalorder %s940, 191
        %s942 = scalar_select %p941, %s940, 191
        %s943 = smul.addr %s942, 8
        %s944 = scalar_lea.vmem %s1, %s943
        %p945 = pneg %p60
        %p946 = pneg %p57
        %p947 = pneg %p86
        %p948 = pneg %p83
        %p949 = scmp.lt.s32.totalorder %s13, 1
        %s950 = scalar_select %p949, %s13, 1
        %s951 = smul.addr %s950, 2
        %s952 = scalar_lea.vmem %s2, %s951
        %s953 = smul.u32 96, %s13
        %s954 = smul.u32 96, %s13
        %p955 = scmp.lt.s32.totalorder %s954, 191
        %s956 = scalar_select %p955, %s954, 191
        %s957 = smul.addr %s956, 8
        %s958 = scalar_lea.vmem %s1, %s957
        %s959 = smul.u32 96, %s13
        %p960 = scmp.lt.s32.totalorder %s13, 1
        %s961 = scalar_select %p960, %s13, 1
        %s962 = smul.addr %s961, 2
        %s963 = scalar_lea.vmem %s2, %s962
        %v964 = vld [vmem:[%s930] sm:$0xff]
        %v965 = vld [vmem:[%s930 + $0x8] sm:$0xff]
        %v966 = vld [vmem:[%s930 + $0x10] sm:$0xff]
        %v967 = vld [vmem:[%s930 + $0x18] sm:$0xff]
        %v968 = vld [vmem:[%s930 + $0x20] sm:$0xff]
        %v969 = vld [vmem:[%s930 + $0x28] sm:$0xff]
        %v970 = vld [vmem:[%s930 + $0x30] sm:$0xff]
        %v971 = vld [vmem:[%s930 + $0x38] sm:$0xff]
        %v972 = vld [vmem:[%s930 + $0x40] sm:$0xff]
        %v973 = vld [vmem:[%s930 + $0x48] sm:$0xff]
        %v974 = vld [vmem:[%s930 + $0x50] sm:$0xff]
        %v975 = vld [vmem:[%s930 + $0x58] sm:$0xff]
        %v976 = vld [vmem:[%s930 + $0x60] sm:$0xff]
        %v977 = vld [vmem:[%s930 + $0x68] sm:$0xff]
        %v978 = vld [vmem:[%s930 + $0x70] sm:$0xff]
        %v979 = vld [vmem:[%s930 + $0x78] sm:$0xff]
        %v980 = vld [vmem:[%s930 + $0x80] sm:$0xff]
        %v981 = vld [vmem:[%s930 + $0x88] sm:$0xff]
        %v982 = vld [vmem:[%s930 + $0x90] sm:$0xff]
        %v983 = vld [vmem:[%s930 + $0x98] sm:$0xff]
        %v984 = vld [vmem:[%s930 + $0xa0] sm:$0xff]
        %v985 = vld [vmem:[%s930 + $0xa8] sm:$0xff]
        %v986 = vld [vmem:[%s930 + $0xb0] sm:$0xff]
        %v987 = vld [vmem:[%s930 + $0xb8] sm:$0xff]
        %v988 = vld [vmem:[%s930 + $0xc0] sm:$0xff]
        %v989 = vld [vmem:[%s930 + $0xc8] sm:$0xff]
        %v990 = vld [vmem:[%s930 + $0xd0] sm:$0xff]
        %v991 = vld [vmem:[%s930 + $0xd8] sm:$0xff]
        %v992 = vld [vmem:[%s930 + $0xe0] sm:$0xff]
        %v993 = vld [vmem:[%s930 + $0xe8] sm:$0xff]
        %v994 = vld [vmem:[%s930 + $0xf0] sm:$0xff]
        %v995 = vld [vmem:[%s930 + $0xf8] sm:$0xff]
        %v996 = vld [vmem:[%s930 + $0x100] sm:$0xff]
        %v997 = vld [vmem:[%s930 + $0x108] sm:$0xff]
        %v998 = vld [vmem:[%s930 + $0x110] sm:$0xff]
        %v999 = vld [vmem:[%s930 + $0x118] sm:$0xff]
        %v1000 = vld [vmem:[%s930 + $0x120] sm:$0xff]
        %v1001 = vld [vmem:[%s930 + $0x128] sm:$0xff]
        %v1002 = vld [vmem:[%s930 + $0x130] sm:$0xff]
        %v1003 = vld [vmem:[%s930 + $0x138] sm:$0xff]
        %v1004 = vld [vmem:[%s930 + $0x140] sm:$0xff]
        %v1005 = vld [vmem:[%s930 + $0x148] sm:$0xff]
        %v1006 = vld [vmem:[%s930 + $0x150] sm:$0xff]
        %v1007 = vld [vmem:[%s930 + $0x158] sm:$0xff]
        %v1008 = vld [vmem:[%s930 + $0x160] sm:$0xff]
        %v1009 = vld [vmem:[%s930 + $0x168] sm:$0xff]
        %v1010 = vld [vmem:[%s930 + $0x170] sm:$0xff]
        %v1011 = vld [vmem:[%s930 + $0x178] sm:$0xff]
        %v1012 = vld [vmem:[%s930 + $0x180] sm:$0xff]
        %v1013 = vld [vmem:[%s930 + $0x188] sm:$0xff]
        %v1014 = vld [vmem:[%s930 + $0x190] sm:$0xff]
        %v1015 = vld [vmem:[%s930 + $0x198] sm:$0xff]
        %v1016 = vld [vmem:[%s930 + $0x1a0] sm:$0xff]
        %v1017 = vld [vmem:[%s930 + $0x1a8] sm:$0xff]
        %v1018 = vld [vmem:[%s930 + $0x1b0] sm:$0xff]
        %v1019 = vld [vmem:[%s930 + $0x1b8] sm:$0xff]
        %v1020 = vld [vmem:[%s930 + $0x1c0] sm:$0xff]
        %v1021 = vld [vmem:[%s930 + $0x1c8] sm:$0xff]
        %v1022 = vld [vmem:[%s930 + $0x1d0] sm:$0xff]
        %v1023 = vld [vmem:[%s930 + $0x1d8] sm:$0xff]
        %v1024 = vld [vmem:[%s930 + $0x1e0] sm:$0xff]
        %v1025 = vld [vmem:[%s930 + $0x1e8] sm:$0xff]
        %v1026 = vld [vmem:[%s930 + $0x1f0] sm:$0xff]
        %v1027 = vld [vmem:[%s930 + $0x1f8] sm:$0xff]
        %v1028 = vld [vmem:[%s930 + $0x200] sm:$0xff]
        %v1029 = vld [vmem:[%s930 + $0x208] sm:$0xff]
        %v1030 = vld [vmem:[%s930 + $0x210] sm:$0xff]
        %v1031 = vld [vmem:[%s930 + $0x218] sm:$0xff]
        %v1032 = vld [vmem:[%s930 + $0x220] sm:$0xff]
        %v1033 = vld [vmem:[%s930 + $0x228] sm:$0xff]
        %v1034 = vld [vmem:[%s930 + $0x230] sm:$0xff]
        %v1035 = vld [vmem:[%s930 + $0x238] sm:$0xff]
        %v1036 = vld [vmem:[%s930 + $0x240] sm:$0xff]
        %v1037 = vld [vmem:[%s930 + $0x248] sm:$0xff]
        %v1038 = vld [vmem:[%s930 + $0x250] sm:$0xff]
        %v1039 = vld [vmem:[%s930 + $0x258] sm:$0xff]
        %v1040 = vld [vmem:[%s930 + $0x260] sm:$0xff]
        %v1041 = vld [vmem:[%s930 + $0x268] sm:$0xff]
        %v1042 = vld [vmem:[%s930 + $0x270] sm:$0xff]
        %v1043 = vld [vmem:[%s930 + $0x278] sm:$0xff]
        %v1044 = vld [vmem:[%s930 + $0x280] sm:$0xff]
        %v1045 = vld [vmem:[%s930 + $0x288] sm:$0xff]
        %v1046 = vld [vmem:[%s930 + $0x290] sm:$0xff]
        %v1047 = vld [vmem:[%s930 + $0x298] sm:$0xff]
        %v1048 = vld [vmem:[%s930 + $0x2a0] sm:$0xff]
        %v1049 = vld [vmem:[%s930 + $0x2a8] sm:$0xff]
        %v1050 = vld [vmem:[%s930 + $0x2b0] sm:$0xff]
        %v1051 = vld [vmem:[%s930 + $0x2b8] sm:$0xff]
        %v1052 = vld [vmem:[%s930 + $0x2c0] sm:$0xff]
        %v1053 = vld [vmem:[%s930 + $0x2c8] sm:$0xff]
        %v1054 = vld [vmem:[%s930 + $0x2d0] sm:$0xff]
        %v1055 = vld [vmem:[%s930 + $0x2d8] sm:$0xff]
        %v1056 = vld [vmem:[%s930 + $0x2e0] sm:$0xff]
        %v1057 = vld [vmem:[%s930 + $0x2e8] sm:$0xff]
        %v1058 = vld [vmem:[%s930 + $0x2f0] sm:$0xff]
        %v1059 = vld [vmem:[%s930 + $0x2f8] sm:$0xff]
        %v1060 = vld [vmem:[%s930 + $0x300] sm:$0xff]
        %v1061 = vld [vmem:[%s930 + $0x308] sm:$0xff]
        %v1062 = vld [vmem:[%s930 + $0x310] sm:$0xff]
        %v1063 = vld [vmem:[%s930 + $0x318] sm:$0xff]
        %v1064 = vld [vmem:[%s930 + $0x320] sm:$0xff]
        %v1065 = vld [vmem:[%s930 + $0x328] sm:$0xff]
        %v1066 = vld [vmem:[%s930 + $0x330] sm:$0xff]
        %v1067 = vld [vmem:[%s930 + $0x338] sm:$0xff]
        %v1068 = vld [vmem:[%s930 + $0x340] sm:$0xff]
        %v1069 = vld [vmem:[%s930 + $0x348] sm:$0xff]
        %v1070 = vld [vmem:[%s930 + $0x350] sm:$0xff]
        %v1071 = vld [vmem:[%s930 + $0x358] sm:$0xff]
        %v1072 = vld [vmem:[%s930 + $0x360] sm:$0xff]
        %v1073 = vld [vmem:[%s930 + $0x368] sm:$0xff]
        %v1074 = vld [vmem:[%s930 + $0x370] sm:$0xff]
        %v1075 = vld [vmem:[%s930 + $0x378] sm:$0xff]
        %v1076 = vld [vmem:[%s930 + $0x380] sm:$0xff]
        %v1077 = vld [vmem:[%s930 + $0x388] sm:$0xff]
        %v1078 = vld [vmem:[%s930 + $0x390] sm:$0xff]
        %v1079 = vld [vmem:[%s930 + $0x398] sm:$0xff]
        %v1080 = vld [vmem:[%s930 + $0x3a0] sm:$0xff]
        %v1081 = vld [vmem:[%s930 + $0x3a8] sm:$0xff]
        %v1082 = vld [vmem:[%s930 + $0x3b0] sm:$0xff]
        %v1083 = vld [vmem:[%s930 + $0x3b8] sm:$0xff]
        %v1084 = vld [vmem:[%s930 + $0x3c0] sm:$0xff]
        %v1085 = vld [vmem:[%s930 + $0x3c8] sm:$0xff]
        %v1086 = vld [vmem:[%s930 + $0x3d0] sm:$0xff]
        %v1087 = vld [vmem:[%s930 + $0x3d8] sm:$0xff]
        %v1088 = vld [vmem:[%s930 + $0x3e0] sm:$0xff]
        %v1089 = vld [vmem:[%s930 + $0x3e8] sm:$0xff]
        %v1090 = vld [vmem:[%s930 + $0x3f0] sm:$0xff]
        %v1091 = vld [vmem:[%s930 + $0x3f8] sm:$0xff]
        %v1092 = vld [vmem:[%s930 + $0x400] sm:$0xff]
        %v1093 = vld [vmem:[%s930 + $0x408] sm:$0xff]
        %v1094 = vld [vmem:[%s930 + $0x410] sm:$0xff]
        %v1095 = vld [vmem:[%s930 + $0x418] sm:$0xff]
        %v1096 = vld [vmem:[%s930 + $0x420] sm:$0xff]
        %v1097 = vld [vmem:[%s930 + $0x428] sm:$0xff]
        %v1098 = vld [vmem:[%s930 + $0x430] sm:$0xff]
        %v1099 = vld [vmem:[%s930 + $0x438] sm:$0xff]
        %v1100 = vld [vmem:[%s930 + $0x440] sm:$0xff]
        %v1101 = vld [vmem:[%s930 + $0x448] sm:$0xff]
        %v1102 = vld [vmem:[%s930 + $0x450] sm:$0xff]
        %v1103 = vld [vmem:[%s930 + $0x458] sm:$0xff]
        %v1104 = vld [vmem:[%s930 + $0x460] sm:$0xff]
        %v1105 = vld [vmem:[%s930 + $0x468] sm:$0xff]
        %v1106 = vld [vmem:[%s930 + $0x470] sm:$0xff]
        %v1107 = vld [vmem:[%s930 + $0x478] sm:$0xff]
        %v1108 = vld [vmem:[%s930 + $0x480] sm:$0xff]
        %v1109 = vld [vmem:[%s930 + $0x488] sm:$0xff]
        %v1110 = vld [vmem:[%s930 + $0x490] sm:$0xff]
        %v1111 = vld [vmem:[%s930 + $0x498] sm:$0xff]
        %v1112 = vld [vmem:[%s930 + $0x4a0] sm:$0xff]
        %v1113 = vld [vmem:[%s930 + $0x4a8] sm:$0xff]
        %v1114 = vld [vmem:[%s930 + $0x4b0] sm:$0xff]
        %v1115 = vld [vmem:[%s930 + $0x4b8] sm:$0xff]
        %v1116 = vld [vmem:[%s930 + $0x4c0] sm:$0xff]
        %v1117 = vld [vmem:[%s930 + $0x4c8] sm:$0xff]
        %v1118 = vld [vmem:[%s930 + $0x4d0] sm:$0xff]
        %v1119 = vld [vmem:[%s930 + $0x4d8] sm:$0xff]
        %v1120 = vld [vmem:[%s930 + $0x4e0] sm:$0xff]
        %v1121 = vld [vmem:[%s930 + $0x4e8] sm:$0xff]
        %v1122 = vld [vmem:[%s930 + $0x4f0] sm:$0xff]
        %v1123 = vld [vmem:[%s930 + $0x4f8] sm:$0xff]
        %v1124 = vld [vmem:[%s930 + $0x500] sm:$0xff]
        %v1125 = vld [vmem:[%s930 + $0x508] sm:$0xff]
        %v1126 = vld [vmem:[%s930 + $0x510] sm:$0xff]
        %v1127 = vld [vmem:[%s930 + $0x518] sm:$0xff]
        %v1128 = vld [vmem:[%s930 + $0x520] sm:$0xff]
        %v1129 = vld [vmem:[%s930 + $0x528] sm:$0xff]
        %v1130 = vld [vmem:[%s930 + $0x530] sm:$0xff]
        %v1131 = vld [vmem:[%s930 + $0x538] sm:$0xff]
        %v1132 = vld [vmem:[%s930 + $0x540] sm:$0xff]
        %v1133 = vld [vmem:[%s930 + $0x548] sm:$0xff]
        %v1134 = vld [vmem:[%s930 + $0x550] sm:$0xff]
        %v1135 = vld [vmem:[%s930 + $0x558] sm:$0xff]
        %v1136 = vld [vmem:[%s930 + $0x560] sm:$0xff]
        %v1137 = vld [vmem:[%s930 + $0x568] sm:$0xff]
        %v1138 = vld [vmem:[%s930 + $0x570] sm:$0xff]
        %v1139 = vld [vmem:[%s930 + $0x578] sm:$0xff]
        %v1140 = vld [vmem:[%s930 + $0x580] sm:$0xff]
        %v1141 = vld [vmem:[%s930 + $0x588] sm:$0xff]
        %v1142 = vld [vmem:[%s930 + $0x590] sm:$0xff]
        %v1143 = vld [vmem:[%s930 + $0x598] sm:$0xff]
        %v1144 = vld [vmem:[%s930 + $0x5a0] sm:$0xff]
        %v1145 = vld [vmem:[%s930 + $0x5a8] sm:$0xff]
        %v1146 = vld [vmem:[%s930 + $0x5b0] sm:$0xff]
        %v1147 = vld [vmem:[%s930 + $0x5b8] sm:$0xff]
        %v1148 = vld [vmem:[%s930 + $0x5c0] sm:$0xff]
        %v1149 = vld [vmem:[%s930 + $0x5c8] sm:$0xff]
        %v1150 = vld [vmem:[%s930 + $0x5d0] sm:$0xff]
        %v1151 = vld [vmem:[%s930 + $0x5d8] sm:$0xff]
        %v1152 = vld [vmem:[%s930 + $0x5e0] sm:$0xff]
        %v1153 = vld [vmem:[%s930 + $0x5e8] sm:$0xff]
        %v1154 = vld [vmem:[%s930 + $0x5f0] sm:$0xff]
        %v1155 = vld [vmem:[%s930 + $0x5f8] sm:$0xff]
        %v1156 = vld [vmem:[%s958] sm:$0xff]
        %v1157 = vld [vmem:[%s958 + $0x8] sm:$0xff]
        %v1158 = vld [vmem:[%s958 + $0x10] sm:$0xff]
        %v1159 = vld [vmem:[%s958 + $0x18] sm:$0xff]
        %v1160 = vld [vmem:[%s958 + $0x20] sm:$0xff]
        %v1161 = vld [vmem:[%s958 + $0x28] sm:$0xff]
        %v1162 = vld [vmem:[%s958 + $0x30] sm:$0xff]
        %v1163 = vld [vmem:[%s958 + $0x38] sm:$0xff]
        %v1164 = vld [vmem:[%s958 + $0x40] sm:$0xff]
        %v1165 = vld [vmem:[%s958 + $0x48] sm:$0xff]
        %v1166 = vld [vmem:[%s958 + $0x50] sm:$0xff]
        %v1167 = vld [vmem:[%s958 + $0x58] sm:$0xff]
        %v1168 = vld [vmem:[%s958 + $0x60] sm:$0xff]
        %v1169 = vld [vmem:[%s958 + $0x68] sm:$0xff]
        %v1170 = vld [vmem:[%s958 + $0x70] sm:$0xff]
        %v1171 = vld [vmem:[%s958 + $0x78] sm:$0xff]
        %v1172 = vld [vmem:[%s958 + $0x80] sm:$0xff]
        %v1173 = vld [vmem:[%s958 + $0x88] sm:$0xff]
        %v1174 = vld [vmem:[%s958 + $0x90] sm:$0xff]
        %v1175 = vld [vmem:[%s958 + $0x98] sm:$0xff]
        %v1176 = vld [vmem:[%s958 + $0xa0] sm:$0xff]
        %v1177 = vld [vmem:[%s958 + $0xa8] sm:$0xff]
        %v1178 = vld [vmem:[%s958 + $0xb0] sm:$0xff]
        %v1179 = vld [vmem:[%s958 + $0xb8] sm:$0xff]
        %v1180 = vld [vmem:[%s958 + $0xc0] sm:$0xff]
        %v1181 = vld [vmem:[%s958 + $0xc8] sm:$0xff]
        %v1182 = vld [vmem:[%s958 + $0xd0] sm:$0xff]
        %v1183 = vld [vmem:[%s958 + $0xd8] sm:$0xff]
        %v1184 = vld [vmem:[%s958 + $0xe0] sm:$0xff]
        %v1185 = vld [vmem:[%s958 + $0xe8] sm:$0xff]
        %v1186 = vld [vmem:[%s958 + $0xf0] sm:$0xff]
        %v1187 = vld [vmem:[%s958 + $0xf8] sm:$0xff]
        %v1188 = vld [vmem:[%s958 + $0x100] sm:$0xff]
        %v1189 = vld [vmem:[%s958 + $0x108] sm:$0xff]
        %v1190 = vld [vmem:[%s958 + $0x110] sm:$0xff]
        %v1191 = vld [vmem:[%s958 + $0x118] sm:$0xff]
        %v1192 = vld [vmem:[%s958 + $0x120] sm:$0xff]
        %v1193 = vld [vmem:[%s958 + $0x128] sm:$0xff]
        %v1194 = vld [vmem:[%s958 + $0x130] sm:$0xff]
        %v1195 = vld [vmem:[%s958 + $0x138] sm:$0xff]
        %v1196 = vld [vmem:[%s958 + $0x140] sm:$0xff]
        %v1197 = vld [vmem:[%s958 + $0x148] sm:$0xff]
        %v1198 = vld [vmem:[%s958 + $0x150] sm:$0xff]
        %v1199 = vld [vmem:[%s958 + $0x158] sm:$0xff]
        %v1200 = vld [vmem:[%s958 + $0x160] sm:$0xff]
        %v1201 = vld [vmem:[%s958 + $0x168] sm:$0xff]
        %v1202 = vld [vmem:[%s958 + $0x170] sm:$0xff]
        %v1203 = vld [vmem:[%s958 + $0x178] sm:$0xff]
        %v1204 = vld [vmem:[%s958 + $0x180] sm:$0xff]
        %v1205 = vld [vmem:[%s958 + $0x188] sm:$0xff]
        %v1206 = vld [vmem:[%s958 + $0x190] sm:$0xff]
        %v1207 = vld [vmem:[%s958 + $0x198] sm:$0xff]
        %v1208 = vld [vmem:[%s958 + $0x1a0] sm:$0xff]
        %v1209 = vld [vmem:[%s958 + $0x1a8] sm:$0xff]
        %v1210 = vld [vmem:[%s958 + $0x1b0] sm:$0xff]
        %v1211 = vld [vmem:[%s958 + $0x1b8] sm:$0xff]
        %v1212 = vld [vmem:[%s958 + $0x1c0] sm:$0xff]
        %v1213 = vld [vmem:[%s958 + $0x1c8] sm:$0xff]
        %v1214 = vld [vmem:[%s958 + $0x1d0] sm:$0xff]
        %v1215 = vld [vmem:[%s958 + $0x1d8] sm:$0xff]
        %v1216 = vld [vmem:[%s958 + $0x1e0] sm:$0xff]
        %v1217 = vld [vmem:[%s958 + $0x1e8] sm:$0xff]
        %v1218 = vld [vmem:[%s958 + $0x1f0] sm:$0xff]
        %v1219 = vld [vmem:[%s958 + $0x1f8] sm:$0xff]
        %v1220 = vld [vmem:[%s958 + $0x200] sm:$0xff]
        %v1221 = vld [vmem:[%s958 + $0x208] sm:$0xff]
        %v1222 = vld [vmem:[%s958 + $0x210] sm:$0xff]
        %v1223 = vld [vmem:[%s958 + $0x218] sm:$0xff]
        %v1224 = vld [vmem:[%s958 + $0x220] sm:$0xff]
        %v1225 = vld [vmem:[%s958 + $0x228] sm:$0xff]
        %v1226 = vld [vmem:[%s958 + $0x230] sm:$0xff]
        %v1227 = vld [vmem:[%s958 + $0x238] sm:$0xff]
        %v1228 = vld [vmem:[%s958 + $0x240] sm:$0xff]
        %v1229 = vld [vmem:[%s958 + $0x248] sm:$0xff]
        %v1230 = vld [vmem:[%s958 + $0x250] sm:$0xff]
        %v1231 = vld [vmem:[%s958 + $0x258] sm:$0xff]
        %v1232 = vld [vmem:[%s958 + $0x260] sm:$0xff]
        %v1233 = vld [vmem:[%s958 + $0x268] sm:$0xff]
        %v1234 = vld [vmem:[%s958 + $0x270] sm:$0xff]
        %v1235 = vld [vmem:[%s958 + $0x278] sm:$0xff]
        %v1236 = vld [vmem:[%s958 + $0x280] sm:$0xff]
        %v1237 = vld [vmem:[%s958 + $0x288] sm:$0xff]
        %v1238 = vld [vmem:[%s958 + $0x290] sm:$0xff]
        %v1239 = vld [vmem:[%s958 + $0x298] sm:$0xff]
        %v1240 = vld [vmem:[%s958 + $0x2a0] sm:$0xff]
        %v1241 = vld [vmem:[%s958 + $0x2a8] sm:$0xff]
        %v1242 = vld [vmem:[%s958 + $0x2b0] sm:$0xff]
        %v1243 = vld [vmem:[%s958 + $0x2b8] sm:$0xff]
        %v1244 = vld [vmem:[%s958 + $0x2c0] sm:$0xff]
        %v1245 = vld [vmem:[%s958 + $0x2c8] sm:$0xff]
        %v1246 = vld [vmem:[%s958 + $0x2d0] sm:$0xff]
        %v1247 = vld [vmem:[%s958 + $0x2d8] sm:$0xff]
        %v1248 = vld [vmem:[%s958 + $0x2e0] sm:$0xff]
        %v1249 = vld [vmem:[%s958 + $0x2e8] sm:$0xff]
        %v1250 = vld [vmem:[%s958 + $0x2f0] sm:$0xff]
        %v1251 = vld [vmem:[%s958 + $0x2f8] sm:$0xff]
        %v1252 = vmul.f32 %v964, %v1156
        %v1253 = vmul.f32 %v965, %v1157
        %v1254 = vmul.f32 %v966, %v1158
        %v1255 = vmul.f32 %v967, %v1159
        %v1256 = vmul.f32 %v968, %v1160
        %v1257 = vmul.f32 %v969, %v1161
        %v1258 = vmul.f32 %v970, %v1162
        %v1259 = vmul.f32 %v971, %v1163
        %v1260 = vmul.f32 %v972, %v1164
        %v1261 = vmul.f32 %v973, %v1165
        %v1262 = vmul.f32 %v974, %v1166
        %v1263 = vmul.f32 %v975, %v1167
        %v1264 = vmul.f32 %v976, %v1168
        %v1265 = vmul.f32 %v977, %v1169
        %v1266 = vmul.f32 %v978, %v1170
        %v1267 = vmul.f32 %v979, %v1171
        %v1268 = vmul.f32 %v980, %v1172
        %v1269 = vmul.f32 %v981, %v1173
        %v1270 = vmul.f32 %v982, %v1174
        %v1271 = vmul.f32 %v983, %v1175
        %v1272 = vmul.f32 %v984, %v1176
        %v1273 = vmul.f32 %v985, %v1177
        %v1274 = vmul.f32 %v986, %v1178
        %v1275 = vmul.f32 %v987, %v1179
        %v1276 = vmul.f32 %v988, %v1180
        %v1277 = vmul.f32 %v989, %v1181
        %v1278 = vmul.f32 %v990, %v1182
        %v1279 = vmul.f32 %v991, %v1183
        %v1280 = vmul.f32 %v992, %v1184
        %v1281 = vmul.f32 %v993, %v1185
        %v1282 = vmul.f32 %v994, %v1186
        %v1283 = vmul.f32 %v995, %v1187
        %v1284 = vmul.f32 %v996, %v1188
        %v1285 = vmul.f32 %v997, %v1189
        %v1286 = vmul.f32 %v998, %v1190
        %v1287 = vmul.f32 %v999, %v1191
        %v1288 = vmul.f32 %v1000, %v1192
        %v1289 = vmul.f32 %v1001, %v1193
        %v1290 = vmul.f32 %v1002, %v1194
        %v1291 = vmul.f32 %v1003, %v1195
        %v1292 = vmul.f32 %v1004, %v1196
        %v1293 = vmul.f32 %v1005, %v1197
        %v1294 = vmul.f32 %v1006, %v1198
        %v1295 = vmul.f32 %v1007, %v1199
        %v1296 = vmul.f32 %v1008, %v1200
        %v1297 = vmul.f32 %v1009, %v1201
        %v1298 = vmul.f32 %v1010, %v1202
        %v1299 = vmul.f32 %v1011, %v1203
        %v1300 = vmul.f32 %v1012, %v1204
        %v1301 = vmul.f32 %v1013, %v1205
        %v1302 = vmul.f32 %v1014, %v1206
        %v1303 = vmul.f32 %v1015, %v1207
        %v1304 = vmul.f32 %v1016, %v1208
        %v1305 = vmul.f32 %v1017, %v1209
        %v1306 = vmul.f32 %v1018, %v1210
        %v1307 = vmul.f32 %v1019, %v1211
        %v1308 = vmul.f32 %v1020, %v1212
        %v1309 = vmul.f32 %v1021, %v1213
        %v1310 = vmul.f32 %v1022, %v1214
        %v1311 = vmul.f32 %v1023, %v1215
        %v1312 = vmul.f32 %v1024, %v1216
        %v1313 = vmul.f32 %v1025, %v1217
        %v1314 = vmul.f32 %v1026, %v1218
        %v1315 = vmul.f32 %v1027, %v1219
        %v1316 = vmul.f32 %v1028, %v1220
        %v1317 = vmul.f32 %v1029, %v1221
        %v1318 = vmul.f32 %v1030, %v1222
        %v1319 = vmul.f32 %v1031, %v1223
        %v1320 = vmul.f32 %v1032, %v1224
        %v1321 = vmul.f32 %v1033, %v1225
        %v1322 = vmul.f32 %v1034, %v1226
        %v1323 = vmul.f32 %v1035, %v1227
        %v1324 = vmul.f32 %v1036, %v1228
        %v1325 = vmul.f32 %v1037, %v1229
        %v1326 = vmul.f32 %v1038, %v1230
        %v1327 = vmul.f32 %v1039, %v1231
        %v1328 = vmul.f32 %v1040, %v1232
        %v1329 = vmul.f32 %v1041, %v1233
        %v1330 = vmul.f32 %v1042, %v1234
        %v1331 = vmul.f32 %v1043, %v1235
        %v1332 = vmul.f32 %v1044, %v1236
        %v1333 = vmul.f32 %v1045, %v1237
        %v1334 = vmul.f32 %v1046, %v1238
        %v1335 = vmul.f32 %v1047, %v1239
        %v1336 = vmul.f32 %v1048, %v1240
        %v1337 = vmul.f32 %v1049, %v1241
        %v1338 = vmul.f32 %v1050, %v1242
        %v1339 = vmul.f32 %v1051, %v1243
        %v1340 = vmul.f32 %v1052, %v1244
        %v1341 = vmul.f32 %v1053, %v1245
        %v1342 = vmul.f32 %v1054, %v1246
        %v1343 = vmul.f32 %v1055, %v1247
        %v1344 = vmul.f32 %v1056, %v1248
        %v1345 = vmul.f32 %v1057, %v1249
        %v1346 = vmul.f32 %v1058, %v1250
        %v1347 = vmul.f32 %v1059, %v1251
        %v1348 = vmul.f32 %v1060, %v1156
        %v1349 = vmul.f32 %v1061, %v1157
        %v1350 = vmul.f32 %v1062, %v1158
        %v1351 = vmul.f32 %v1063, %v1159
        %v1352 = vmul.f32 %v1064, %v1160
        %v1353 = vmul.f32 %v1065, %v1161
        %v1354 = vmul.f32 %v1066, %v1162
        %v1355 = vmul.f32 %v1067, %v1163
        %v1356 = vmul.f32 %v1068, %v1164
        %v1357 = vmul.f32 %v1069, %v1165
        %v1358 = vmul.f32 %v1070, %v1166
        %v1359 = vmul.f32 %v1071, %v1167
        %v1360 = vmul.f32 %v1072, %v1168
        %v1361 = vmul.f32 %v1073, %v1169
        %v1362 = vmul.f32 %v1074, %v1170
        %v1363 = vmul.f32 %v1075, %v1171
        %v1364 = vmul.f32 %v1076, %v1172
        %v1365 = vmul.f32 %v1077, %v1173
        %v1366 = vmul.f32 %v1078, %v1174
        %v1367 = vmul.f32 %v1079, %v1175
        %v1368 = vmul.f32 %v1080, %v1176
        %v1369 = vmul.f32 %v1081, %v1177
        %v1370 = vmul.f32 %v1082, %v1178
        %v1371 = vmul.f32 %v1083, %v1179
        %v1372 = vmul.f32 %v1084, %v1180
        %v1373 = vmul.f32 %v1085, %v1181
        %v1374 = vmul.f32 %v1086, %v1182
        %v1375 = vmul.f32 %v1087, %v1183
        %v1376 = vmul.f32 %v1088, %v1184
        %v1377 = vmul.f32 %v1089, %v1185
        %v1378 = vmul.f32 %v1090, %v1186
        %v1379 = vmul.f32 %v1091, %v1187
        %v1380 = vmul.f32 %v1092, %v1188
        %v1381 = vmul.f32 %v1093, %v1189
        %v1382 = vmul.f32 %v1094, %v1190
        %v1383 = vmul.f32 %v1095, %v1191
        %v1384 = vmul.f32 %v1096, %v1192
        %v1385 = vmul.f32 %v1097, %v1193
        %v1386 = vmul.f32 %v1098, %v1194
        %v1387 = vmul.f32 %v1099, %v1195
        %v1388 = vmul.f32 %v1100, %v1196
        %v1389 = vmul.f32 %v1101, %v1197
        %v1390 = vmul.f32 %v1102, %v1198
        %v1391 = vmul.f32 %v1103, %v1199
        %v1392 = vmul.f32 %v1104, %v1200
        %v1393 = vmul.f32 %v1105, %v1201
        %v1394 = vmul.f32 %v1106, %v1202
        %v1395 = vmul.f32 %v1107, %v1203
        %v1396 = vmul.f32 %v1108, %v1204
        %v1397 = vmul.f32 %v1109, %v1205
        %v1398 = vmul.f32 %v1110, %v1206
        %v1399 = vmul.f32 %v1111, %v1207
        %v1400 = vmul.f32 %v1112, %v1208
        %v1401 = vmul.f32 %v1113, %v1209
        %v1402 = vmul.f32 %v1114, %v1210
        %v1403 = vmul.f32 %v1115, %v1211
        %v1404 = vmul.f32 %v1116, %v1212
        %v1405 = vmul.f32 %v1117, %v1213
        %v1406 = vmul.f32 %v1118, %v1214
        %v1407 = vmul.f32 %v1119, %v1215
        %v1408 = vmul.f32 %v1120, %v1216
        %v1409 = vmul.f32 %v1121, %v1217
        %v1410 = vmul.f32 %v1122, %v1218
        %v1411 = vmul.f32 %v1123, %v1219
        %v1412 = vmul.f32 %v1124, %v1220
        %v1413 = vmul.f32 %v1125, %v1221
        %v1414 = vmul.f32 %v1126, %v1222
        %v1415 = vmul.f32 %v1127, %v1223
        %v1416 = vmul.f32 %v1128, %v1224
        %v1417 = vmul.f32 %v1129, %v1225
        %v1418 = vmul.f32 %v1130, %v1226
        %v1419 = vmul.f32 %v1131, %v1227
        %v1420 = vmul.f32 %v1132, %v1228
        %v1421 = vmul.f32 %v1133, %v1229
        %v1422 = vmul.f32 %v1134, %v1230
        %v1423 = vmul.f32 %v1135, %v1231
        %v1424 = vmul.f32 %v1136, %v1232
        %v1425 = vmul.f32 %v1137, %v1233
        %v1426 = vmul.f32 %v1138, %v1234
        %v1427 = vmul.f32 %v1139, %v1235
        %v1428 = vmul.f32 %v1140, %v1236
        %v1429 = vmul.f32 %v1141, %v1237
        %v1430 = vmul.f32 %v1142, %v1238
        %v1431 = vmul.f32 %v1143, %v1239
        %v1432 = vmul.f32 %v1144, %v1240
        %v1433 = vmul.f32 %v1145, %v1241
        %v1434 = vmul.f32 %v1146, %v1242
        %v1435 = vmul.f32 %v1147, %v1243
        %v1436 = vmul.f32 %v1148, %v1244
        %v1437 = vmul.f32 %v1149, %v1245
        %v1438 = vmul.f32 %v1150, %v1246
        %v1439 = vmul.f32 %v1151, %v1247
        %v1440 = vmul.f32 %v1152, %v1248
        %v1441 = vmul.f32 %v1153, %v1249
        %v1442 = vmul.f32 %v1154, %v1250
        %v1443 = vmul.f32 %v1155, %v1251
        %v1444 = vadd.f32 %v1252, %v1253
        %v1445 = vadd.f32 %v1444, %v1254
        %v1446 = vadd.f32 %v1445, %v1255
        %v1447 = vadd.f32 %v1446, %v1256
        %v1448 = vadd.f32 %v1447, %v1257
        %v1449 = vadd.f32 %v1448, %v1258
        %v1450 = vadd.f32 %v1449, %v1259
        %v1451 = vadd.f32 %v1450, %v1260
        %v1452 = vadd.f32 %v1451, %v1261
        %v1453 = vadd.f32 %v1452, %v1262
        %v1454 = vadd.f32 %v1453, %v1263
        %v1455 = vadd.f32 %v1454, %v1264
        %v1456 = vadd.f32 %v1455, %v1265
        %v1457 = vadd.f32 %v1456, %v1266
        %v1458 = vadd.f32 %v1457, %v1267
        %v1459 = vadd.f32 %v1458, %v1268
        %v1460 = vadd.f32 %v1459, %v1269
        %v1461 = vadd.f32 %v1460, %v1270
        %v1462 = vadd.f32 %v1461, %v1271
        %v1463 = vadd.f32 %v1462, %v1272
        %v1464 = vadd.f32 %v1463, %v1273
        %v1465 = vadd.f32 %v1464, %v1274
        %v1466 = vadd.f32 %v1465, %v1275
        %v1467 = vadd.f32 %v1466, %v1276
        %v1468 = vadd.f32 %v1467, %v1277
        %v1469 = vadd.f32 %v1468, %v1278
        %v1470 = vadd.f32 %v1469, %v1279
        %v1471 = vadd.f32 %v1470, %v1280
        %v1472 = vadd.f32 %v1471, %v1281
        %v1473 = vadd.f32 %v1472, %v1282
        %v1474 = vadd.f32 %v1473, %v1283
        %v1475 = vadd.f32 %v1474, %v1284
        %v1476 = vadd.f32 %v1475, %v1285
        %v1477 = vadd.f32 %v1476, %v1286
        %v1478 = vadd.f32 %v1477, %v1287
        %v1479 = vadd.f32 %v1478, %v1288
        %v1480 = vadd.f32 %v1479, %v1289
        %v1481 = vadd.f32 %v1480, %v1290
        %v1482 = vadd.f32 %v1481, %v1291
        %v1483 = vadd.f32 %v1482, %v1292
        %v1484 = vadd.f32 %v1483, %v1293
        %v1485 = vadd.f32 %v1484, %v1294
        %v1486 = vadd.f32 %v1485, %v1295
        %v1487 = vadd.f32 %v1486, %v1296
        %v1488 = vadd.f32 %v1487, %v1297
        %v1489 = vadd.f32 %v1488, %v1298
        %v1490 = vadd.f32 %v1489, %v1299
        %v1491 = vadd.f32 %v1490, %v1300
        %v1492 = vadd.f32 %v1491, %v1301
        %v1493 = vadd.f32 %v1492, %v1302
        %v1494 = vadd.f32 %v1493, %v1303
        %v1495 = vadd.f32 %v1494, %v1304
        %v1496 = vadd.f32 %v1495, %v1305
        %v1497 = vadd.f32 %v1496, %v1306
        %v1498 = vadd.f32 %v1497, %v1307
        %v1499 = vadd.f32 %v1498, %v1308
        %v1500 = vadd.f32 %v1499, %v1309
        %v1501 = vadd.f32 %v1500, %v1310
        %v1502 = vadd.f32 %v1501, %v1311
        %v1503 = vadd.f32 %v1502, %v1312
        %v1504 = vadd.f32 %v1503, %v1313
        %v1505 = vadd.f32 %v1504, %v1314
        %v1506 = vadd.f32 %v1505, %v1315
        %v1507 = vadd.f32 %v1506, %v1316
        %v1508 = vadd.f32 %v1507, %v1317
        %v1509 = vadd.f32 %v1508, %v1318
        %v1510 = vadd.f32 %v1509, %v1319
        %v1511 = vadd.f32 %v1510, %v1320
        %v1512 = vadd.f32 %v1511, %v1321
        %v1513 = vadd.f32 %v1512, %v1322
        %v1514 = vadd.f32 %v1513, %v1323
        %v1515 = vadd.f32 %v1514, %v1324
        %v1516 = vadd.f32 %v1515, %v1325
        %v1517 = vadd.f32 %v1516, %v1326
        %v1518 = vadd.f32 %v1517, %v1327
        %v1519 = vadd.f32 %v1518, %v1328
        %v1520 = vadd.f32 %v1519, %v1329
        %v1521 = vadd.f32 %v1520, %v1330
        %v1522 = vadd.f32 %v1521, %v1331
        %v1523 = vadd.f32 %v1522, %v1332
        %v1524 = vadd.f32 %v1523, %v1333
        %v1525 = vadd.f32 %v1524, %v1334
        %v1526 = vadd.f32 %v1525, %v1335
        %v1527 = vadd.f32 %v1526, %v1336
        %v1528 = vadd.f32 %v1527, %v1337
        %v1529 = vadd.f32 %v1528, %v1338
        %v1530 = vadd.f32 %v1529, %v1339
        %v1531 = vadd.f32 %v1530, %v1340
        %v1532 = vadd.f32 %v1531, %v1341
        %v1533 = vadd.f32 %v1532, %v1342
        %v1534 = vadd.f32 %v1533, %v1343
        %v1535 = vadd.f32 %v1534, %v1344
        %v1536 = vadd.f32 %v1535, %v1345
        %v1537 = vadd.f32 %v1536, %v1346
        %v1538 = vadd.f32 %v1537, %v1347
        %v1539 = vrot.slane %v1538, 4
        %v1540 = vadd.f32 %v1538, %v1539
        %v1541 = vrot.slane %v1540, 2
        %v1542 = vadd.f32 %v1540, %v1541
        %v1543 = vrot.slane %v1542, 1
        %v1544 = vadd.f32 %v1542, %v1543
        %v1545 = vadd.f32 %v1348, %v1349
        %v1546 = vadd.f32 %v1545, %v1350
        %v1547 = vadd.f32 %v1546, %v1351
        %v1548 = vadd.f32 %v1547, %v1352
        %v1549 = vadd.f32 %v1548, %v1353
        %v1550 = vadd.f32 %v1549, %v1354
        %v1551 = vadd.f32 %v1550, %v1355
        %v1552 = vadd.f32 %v1551, %v1356
        %v1553 = vadd.f32 %v1552, %v1357
        %v1554 = vadd.f32 %v1553, %v1358
        %v1555 = vadd.f32 %v1554, %v1359
        %v1556 = vadd.f32 %v1555, %v1360
        %v1557 = vadd.f32 %v1556, %v1361
        %v1558 = vadd.f32 %v1557, %v1362
        %v1559 = vadd.f32 %v1558, %v1363
        %v1560 = vadd.f32 %v1559, %v1364
        %v1561 = vadd.f32 %v1560, %v1365
        %v1562 = vadd.f32 %v1561, %v1366
        %v1563 = vadd.f32 %v1562, %v1367
        %v1564 = vadd.f32 %v1563, %v1368
        %v1565 = vadd.f32 %v1564, %v1369
        %v1566 = vadd.f32 %v1565, %v1370
        %v1567 = vadd.f32 %v1566, %v1371
        %v1568 = vadd.f32 %v1567, %v1372
        %v1569 = vadd.f32 %v1568, %v1373
        %v1570 = vadd.f32 %v1569, %v1374
        %v1571 = vadd.f32 %v1570, %v1375
        %v1572 = vadd.f32 %v1571, %v1376
        %v1573 = vadd.f32 %v1572, %v1377
        %v1574 = vadd.f32 %v1573, %v1378
        %v1575 = vadd.f32 %v1574, %v1379
        %v1576 = vadd.f32 %v1575, %v1380
        %v1577 = vadd.f32 %v1576, %v1381
        %v1578 = vadd.f32 %v1577, %v1382
        %v1579 = vadd.f32 %v1578, %v1383
        %v1580 = vadd.f32 %v1579, %v1384
        %v1581 = vadd.f32 %v1580, %v1385
        %v1582 = vadd.f32 %v1581, %v1386
        %v1583 = vadd.f32 %v1582, %v1387
        %v1584 = vadd.f32 %v1583, %v1388
        %v1585 = vadd.f32 %v1584, %v1389
        %v1586 = vadd.f32 %v1585, %v1390
        %v1587 = vadd.f32 %v1586, %v1391
        %v1588 = vadd.f32 %v1587, %v1392
        %v1589 = vadd.f32 %v1588, %v1393
        %v1590 = vadd.f32 %v1589, %v1394
        %v1591 = vadd.f32 %v1590, %v1395
        %v1592 = vadd.f32 %v1591, %v1396
        %v1593 = vadd.f32 %v1592, %v1397
        %v1594 = vadd.f32 %v1593, %v1398
        %v1595 = vadd.f32 %v1594, %v1399
        %v1596 = vadd.f32 %v1595, %v1400
        %v1597 = vadd.f32 %v1596, %v1401
        %v1598 = vadd.f32 %v1597, %v1402
        %v1599 = vadd.f32 %v1598, %v1403
        %v1600 = vadd.f32 %v1599, %v1404
        %v1601 = vadd.f32 %v1600, %v1405
        %v1602 = vadd.f32 %v1601, %v1406
        %v1603 = vadd.f32 %v1602, %v1407
        %v1604 = vadd.f32 %v1603, %v1408
        %v1605 = vadd.f32 %v1604, %v1409
        %v1606 = vadd.f32 %v1605, %v1410
        %v1607 = vadd.f32 %v1606, %v1411
        %v1608 = vadd.f32 %v1607, %v1412
        %v1609 = vadd.f32 %v1608, %v1413
        %v1610 = vadd.f32 %v1609, %v1414
        %v1611 = vadd.f32 %v1610, %v1415
        %v1612 = vadd.f32 %v1611, %v1416
        %v1613 = vadd.f32 %v1612, %v1417
        %v1614 = vadd.f32 %v1613, %v1418
        %v1615 = vadd.f32 %v1614, %v1419
        %v1616 = vadd.f32 %v1615, %v1420
        %v1617 = vadd.f32 %v1616, %v1421
        %v1618 = vadd.f32 %v1617, %v1422
        %v1619 = vadd.f32 %v1618, %v1423
        %v1620 = vadd.f32 %v1619, %v1424
        %v1621 = vadd.f32 %v1620, %v1425
        %v1622 = vadd.f32 %v1621, %v1426
        %v1623 = vadd.f32 %v1622, %v1427
        %v1624 = vadd.f32 %v1623, %v1428
        %v1625 = vadd.f32 %v1624, %v1429
        %v1626 = vadd.f32 %v1625, %v1430
        %v1627 = vadd.f32 %v1626, %v1431
        %v1628 = vadd.f32 %v1627, %v1432
        %v1629 = vadd.f32 %v1628, %v1433
        %v1630 = vadd.f32 %v1629, %v1434
        %v1631 = vadd.f32 %v1630, %v1435
        %v1632 = vadd.f32 %v1631, %v1436
        %v1633 = vadd.f32 %v1632, %v1437
        %v1634 = vadd.f32 %v1633, %v1438
        %v1635 = vadd.f32 %v1634, %v1439
        %v1636 = vadd.f32 %v1635, %v1440
        %v1637 = vadd.f32 %v1636, %v1441
        %v1638 = vadd.f32 %v1637, %v1442
        %v1639 = vadd.f32 %v1638, %v1443
        %v1640 = vrot.slane %v1639, 4
        %v1641 = vadd.f32 %v1639, %v1640
        %v1642 = vrot.slane %v1641, 2
        %v1643 = vadd.f32 %v1641, %v1642
        %v1644 = vrot.slane %v1643, 1
        %v1645 = vadd.f32 %v1643, %v1644
        %vm1648 = vcmask 1041409
        %v1649 = vsel %vm1648, %v1645, %v1544
        %vm1651 = vcmask 1041408
        %v1652 = vsel %vm1651, %v1649, 0.0
        %1653 = vadd.xlane.f32.xlu0 %v1652
        %v1654 = vpop.xlane.xlu0 %1653
        %vm1655 = vcmask 1024
        %1656 = vst.msk [vmem:[%s963] sm:$0x3] %vm1655, %v1654
        %p1657 = scmp.lt.s32.totalorder %s13, 1
        %s1658 = scalar_select %p1657, %s13, 1
        %s1659 = smul.addr %s1658, 2
        %s1660 = scalar_lea.vmem %s2, %s1659
        // Predicated region
        $region67: #{model_forward.1} parent=61 // pred_check
          %p1661 = pneg %p83
        $region68: #{model_forward.1} parent=61 // pred_check_branch
          %1663 = sbr.rel (%p1661) target = $region70
        $region69: #{model_forward.1} parent=61 // pred_region
          _
        $region70: #{model_forward.1} parent=61 // pred_fallthru
          _
      $region62: #{model_forward.1} parent=5 // pred_fallthru
        _
      %p1664 = scmp.le.s32.totalorder 2, %s8
      // Predicated region
      $region71: #{model_forward.1} parent=5 // pred_check
        %p1665 = pneg %p1664
      $region72: #{model_forward.1} parent=5 // pred_check_branch
        %1667 = sbr.rel (%p1665) target = $region74
      $region73: #{model_forward.1} parent=5 // pred_region
        %s1668 = ssub.s32 %s8, 2
        // Predicated region
        $region75: #{model_forward.1} parent=73 // pred_check
          %p1669 = pneg %p89
        $region76: #{model_forward.1} parent=73 // pred_check_branch
          %1671 = sbr.rel (%p1669) target = $region78
        $region77: #{model_forward.1} parent=73 // pred_region
          %p1672 = scmp.lt.s32.totalorder %s14, 1
          %s1673 = scalar_select %p1672, %s14, 1
          %s1674 = smul.addr %s1673, 2
          %s1675 = scalar_lea.vmem %s2, %s1674
        $region78: #{model_forward.1} parent=73 // pred_fallthru
          _
      $region74: #{model_forward.1} parent=5 // pred_fallthru
        _
    $region6: #{model_forward.1} parent=1 // loop_footer
      %s12 = sadd.s32 1, %s8
    $region7: #{model_forward.1} parent=1 // loop_footer_branch
      %7 = sbr.rel target = $region3
    $region8: #{model_forward.1} parent=1 // loop_exit
      _

</llo_original>
